<compile_context>
chip_gen: v7x
topology: tpu7x:2x2x1
jax: 0.10.0
libtpu: 0.0.40
codegen_flags: <defaults>
</compile_context>

<pallas_src>
import jax
import jax.numpy as jnp
from jax import lax
from jax.experimental import pallas as pl
from jax.experimental.pallas import tpu as pltpu


# ----------------------------------------------------------------------------
# Kernel
# ----------------------------------------------------------------------------
def _rnn_seq_kernel(obs_ref, h0_ref,
                    w1_ref, b1_ref,
                    wih_ref, bi_ref,
                    whh_ref, bhn_ref,
                    w2_ref, b2_ref,
                    q_ref, hseq_ref,
                    h_scr, gi_scr):
    c = pl.program_id(1)
    Tc, bm, D = obs_ref.shape
    Hp = h_scr.shape[-1]
    Ap = q_ref.shape[-1]
    mm_dtype = w1_ref.dtype

    # New batch tile -> (re)load the initial hidden state into the VMEM carry.
    @pl.when(c == 0)
    def _():
        h_scr[...] = h0_ref[...]

    # ---- Hoisted input-side GEMMs for the whole time chunk (M = Tc*bm) ------
    obs2 = obs_ref[...].reshape(Tc * bm, D).astype(mm_dtype)
    x = jnp.dot(obs2, w1_ref[...], preferred_element_type=jnp.float32)
    x = jnp.maximum(x + b1_ref[...], 0.0)                          # fc1 + ReLU
    gi = jnp.dot(x.astype(mm_dtype), wih_ref[...],
                 preferred_element_type=jnp.float32) + bi_ref[...]  # x@W_ih + b
    gi_scr[...] = gi.reshape(Tc, bm, 3 * Hp)

    # Hoist bias broadcast above the loop (JAX does not CSE broadcast_in_dim).
    bhn = jnp.broadcast_to(bhn_ref[...], (bm, Hp))
    whh = whh_ref[...]

    # ---- Serial recurrence: only h @ W_hh stays on the per-step chain -------
    def step(t, h):
        gi_t = gi_scr[t]                                            # (bm, 3Hp)
        gh = jnp.dot(h.astype(mm_dtype), whh,
                     preferred_element_type=jnp.float32)            # (bm, 3Hp)
        r = jax.nn.sigmoid(gi_t[:, 0:Hp] + gh[:, 0:Hp])
        z = jax.nn.sigmoid(gi_t[:, Hp:2 * Hp] + gh[:, Hp:2 * Hp])
        n = jnp.tanh(gi_t[:, 2 * Hp:] + r * (gh[:, 2 * Hp:] + bhn))
        h_new = (1.0 - z) * n + z * h
        hseq_ref[t] = h_new
        return h_new

    h_last = lax.fori_loop(0, Tc, step, h_scr[...], unroll=(Tc <= 16))
    h_scr[...] = h_last

    # ---- Hoisted output-side GEMM over the whole chunk ----------------------
    h_all = hseq_ref[...].reshape(Tc * bm, Hp).astype(mm_dtype)
    q = jnp.dot(h_all, w2_ref[...],
                preferred_element_type=jnp.float32) + b2_ref[...]
    q_ref[...] = q.reshape(Tc, bm, Ap).astype(q_ref.dtype)


# ----------------------------------------------------------------------------
# Host-side packing / padding (done once per parameter set)
# ----------------------------------------------------------------------------
def _round_up(x, m):
    return ((x + m - 1) // m) * m


def _pad2(a, rows, cols):
    r, c = a.shape
    return jnp.pad(a, ((0, rows - r), (0, cols - c)))


def pack_params(p, Hp, Ap, mm_dtype):
    """Pad to lane-aligned gate blocks, pre-fold biases, cast weights to bf16."""
    D, H = p["w1"].shape

    def pad_gate_w(w):   # (H, 3H) -> (Hp, 3Hp), each gate block lane-aligned
        return jnp.concatenate(
            [_pad2(w[:, g * H:(g + 1) * H], Hp, Hp) for g in range(3)], axis=1)

    def pad_gate_b(b):   # (1, 3H) -> (1, 3Hp)
        return jnp.concatenate(
            [_pad2(b[:, g * H:(g + 1) * H], 1, Hp) for g in range(3)], axis=1)

    b_ih_p = pad_gate_b(p["b_ih"])
    b_hh_p = pad_gate_b(p["b_hh"])
    # Fold b_hh's r/z components into the hoisted gi bias; the n component of
    # b_hh must stay inside the r-multiplication (PyTorch GRUCell semantics).
    bi = b_ih_p.at[:, :2 * Hp].add(b_hh_p[:, :2 * Hp])

    return {
        "w1":  _pad2(p["w1"], D, Hp).astype(mm_dtype),
        "b1":  _pad2(p["b1"], 1, Hp).astype(jnp.float32),
        "wih": pad_gate_w(p["w_ih"]).astype(mm_dtype),
        "bi":  bi.astype(jnp.float32),
        "whh": pad_gate_w(p["w_hh"]).astype(mm_dtype),
        "bhn": _pad2(p["b_hh"][:, 2 * H:3 * H], 1, Hp).astype(jnp.float32),
        "w2":  _pad2(p["w2"], Hp, Ap).astype(mm_dtype),
        "b2":  _pad2(p["b2"], 1, Ap).astype(jnp.float32),
    }


# ----------------------------------------------------------------------------
# Wrappers
# ----------------------------------------------------------------------------
def rnn_forward_seq(obs_seq, hidden_state, params, *, bm=None, tc=None,
                    matmul_dtype=jnp.bfloat16, trim_outputs=True):
    """Run the whole recurrence in one fused pallas_call.

    obs_seq: [T, B, input_dim]; hidden_state: [..., H] (reshaped to [B, H]).
    Returns (q_seq [T, B, n_actions], h_seq [T, B, H]); if trim_outputs=False
    the lane-padded [T, B, Ap]/[T, B, Hp] arrays are returned (avoids an extra
    HBM copy when the consumer can slice lazily).
    """
    T, B, D = obs_seq.shape
    H = params["w1"].shape[1]
    A = params["w2"].shape[1]
    Hp = _round_up(H, 128)
    Ap = _round_up(A, 128)

    bm = B if bm is None else bm            # on v7x pass bm = B // 2 (mult of 8)
    assert B % bm == 0, "batch must be divisible by the batch tile"
    if bm != B:
        assert bm % 8 == 0, "batch tile must be sublane-aligned (multiple of 8)"
    nb = B // bm

    if tc is None:                          # time-chunk size (amortizes grid-step
        tc = T if T <= 64 else max(         # overhead, bounds gi scratch VMEM)
            d for d in range(1, 65) if T % d == 0)
    assert T % tc == 0, "T must be divisible by the time chunk"
    nt = T // tc

    pp = pack_params(params, Hp, Ap, matmul_dtype)
    h0 = hidden_state.reshape(-1, H).astype(jnp.float32)
    h0p = jnp.pad(h0, ((0, 0), (0, Hp - H)))

    def w_spec(shape):  # weight resident in VMEM: constant block index
        return pl.BlockSpec(shape, lambda b, c: (0, 0))

    grid_spec = pltpu.PrefetchScalarGridSpec(
        num_scalar_prefetch=0,
        grid=(nb, nt),
        in_specs=[
            pl.BlockSpec((tc, bm, D), lambda b, c: (c, b, 0)),    # obs_seq
            pl.BlockSpec((bm, Hp), lambda b, c: (b, 0)),          # h0
            w_spec((D, Hp)), w_spec((1, Hp)),                     # fc1
            w_spec((Hp, 3 * Hp)), w_spec((1, 3 * Hp)),            # W_ih / fused bias
            w_spec((Hp, 3 * Hp)), w_spec((1, Hp)),                # W_hh / b_hn
            w_spec((Hp, Ap)), w_spec((1, Ap)),                    # fc2
        ],
        out_specs=(
            pl.BlockSpec((tc, bm, Ap), lambda b, c: (c, b, 0)),   # q_seq
            pl.BlockSpec((tc, bm, Hp), lambda b, c: (c, b, 0)),   # h_seq
        ),
        scratch_shapes=[
            pltpu.VMEM((bm, Hp), jnp.float32),                    # hidden carry
            pltpu.VMEM((tc, bm, 3 * Hp), jnp.float32),            # hoisted gi
        ],
    )

    q_seq_p, h_seq_p = pl.pallas_call(
        _rnn_seq_kernel,
        out_shape=(
            jax.ShapeDtypeStruct((T, B, Ap), jnp.float32),
            jax.ShapeDtypeStruct((T, B, Hp), jnp.float32),
        ),
        grid_spec=grid_spec,
        compiler_params=pltpu.CompilerParams(
            # For large hidden dims on v7x also set vmem_limit_bytes here.
            dimension_semantics=("parallel", "arbitrary"),
        ),
    )(obs_seq.astype(jnp.float32), h0p,
      pp["w1"], pp["b1"], pp["wih"], pp["bi"],
      pp["whh"], pp["bhn"], pp["w2"], pp["b2"])

    if not trim_outputs:
        return q_seq_p, h_seq_p
    return q_seq_p[:, :, :A], h_seq_p[:, :, :H]


def rnn_forward(obs, hidden_state, params, **kw):
    """Single-step API matching the PyTorch module's forward(obs, hidden)."""
    H = params["w1"].shape[1]
    h_in = hidden_state.reshape(-1, H)
    q_seq, h_seq = rnn_forward_seq(obs[None], h_in, params, **kw)
    return q_seq[0], h_seq[0]


# ----------------------------------------------------------------------------
# Parameter init (PyTorch-style uniform), weights stored as [in, out]
# ----------------------------------------------------------------------------
def init_params(key, input_dim, hidden_dim, n_actions):
    ks = jax.random.split(key, 8)
    s1 = 1.0 / jnp.sqrt(input_dim)
    sh = 1.0 / jnp.sqrt(hidden_dim)
    return {
        "w1":   jax.random.uniform(ks[0], (input_dim, hidden_dim), jnp.float32, -s1, s1),
        "b1":   jax.random.uniform(ks[1], (1, hidden_dim), jnp.float32, -s1, s1),
        "w_ih": jax.random.uniform(ks[2], (hidden_dim, 3 * hidden_dim), jnp.float32, -sh, sh),
        "b_ih": jax.random.uniform(ks[3], (1, 3 * hidden_dim), jnp.float32, -sh, sh),
        "w_hh": jax.random.uniform(ks[4], (hidden_dim, 3 * hidden_dim), jnp.float32, -sh, sh),
        "b_hh": jax.random.uniform(ks[5], (1, 3 * hidden_dim), jnp.float32, -sh, sh),
        "w2":   jax.random.uniform(ks[6], (hidden_dim, n_actions), jnp.float32, -sh, sh),
        "b2":   jax.random.uniform(ks[7], (1, n_actions), jnp.float32, -sh, sh),
    }


# ----------------------------------------------------------------------------
# Pure-JAX reference (PyTorch GRUCell semantics, un-fused, un-padded, f32)
# ----------------------------------------------------------------------------
def _ref_step(obs, h, p):
    H = p["w1"].shape[1]
    x = jnp.maximum(obs @ p["w1"] + p["b1"], 0.0)
    gi = x @ p["w_ih"] + p["b_ih"]
    gh = h @ p["w_hh"] + p["b_hh"]
    r = jax.nn.sigmoid(gi[:, :H] + gh[:, :H])
    z = jax.nn.sigmoid(gi[:, H:2 * H] + gh[:, H:2 * H])
    n = jnp.tanh(gi[:, 2 * H:] + r * gh[:, 2 * H:])
    h_new = (1.0 - z) * n + z * h
    q = h_new @ p["w2"] + p["b2"]
    return q, h_new


if __name__ == "__main__":
    import numpy as np

    T, B, INPUT_DIM, HIDDEN, N_ACTIONS = 8, 8, 32, 32, 8

    key = jax.random.PRNGKey(0)
    kp, ko, kh = jax.random.split(key, 3)
    params = init_params(kp, INPUT_DIM, HIDDEN, N_ACTIONS)

    obs_seq = jax.random.normal(ko, (T, B, INPUT_DIM), jnp.float32)
    h0 = jax.random.normal(kh, (B, HIDDEN), jnp.float32)

    # Reference rollout.
    h = h0
    q_list, h_list = [], []
    for t in range(T):
        q_t, h = _ref_step(obs_seq[t], h, params)
        q_list.append(q_t)
        h_list.append(h)
    q_ref = jnp.stack(q_list)
    h_ref = jnp.stack(h_list)

    # f32-matmul path: tight numerical check against the reference.
    q32, h32 = rnn_forward_seq(obs_seq, h0, params, matmul_dtype=jnp.float32)
    q32 = jax.block_until_ready(q32)
    h32 = jax.block_until_ready(h32)
    np.testing.assert_allclose(np.asarray(q32), np.asarray(q_ref), rtol=1e-4, atol=1e-4)
    np.testing.assert_allclose(np.asarray(h32), np.asarray(h_ref), rtol=1e-4, atol=1e-4)

    # Default bf16-matmul path (MXU-native): looser tolerance vs f32 reference.
    qbf, hbf = rnn_forward_seq(obs_seq, h0, params)
    qbf = jax.block_until_ready(qbf)
    hbf = jax.block_until_ready(hbf)
    np.testing.assert_allclose(np.asarray(qbf), np.asarray(q_ref), rtol=5e-2, atol=5e-2)
    np.testing.assert_allclose(np.asarray(hbf), np.asarray(h_ref), rtol=5e-2, atol=5e-2)

    # Single-step API (matches the PyTorch module's forward signature).
    q1, h1 = rnn_forward(obs_seq[0], h0, params, matmul_dtype=jnp.float32)
    q1 = jax.block_until_ready(q1)
    h1 = jax.block_until_ready(h1)
    q1_ref, h1_ref = _ref_step(obs_seq[0], h0, params)
    np.testing.assert_allclose(np.asarray(q1), np.asarray(q1_ref), rtol=1e-4, atol=1e-4)
    np.testing.assert_allclose(np.asarray(h1), np.asarray(h1_ref), rtol=1e-4, atol=1e-4)

    print("KERNEL_OK")
</pallas_src>

<mosaic_0001>
module attributes {stable_mosaic.version = 11 : i64} {
  func.func @_rnn_seq_kernel(%arg0: i32, %arg1: i32, %arg2: memref<8x8x32xf32, #tpu.memory_space<vmem>>, %arg3: memref<8x128xf32, #tpu.memory_space<vmem>>, %arg4: memref<32x128xf32, #tpu.memory_space<vmem>>, %arg5: memref<1x128xf32, #tpu.memory_space<vmem>>, %arg6: memref<128x384xf32, #tpu.memory_space<vmem>>, %arg7: memref<1x384xf32, #tpu.memory_space<vmem>>, %arg8: memref<128x384xf32, #tpu.memory_space<vmem>>, %arg9: memref<1x128xf32, #tpu.memory_space<vmem>>, %arg10: memref<128x128xf32, #tpu.memory_space<vmem>>, %arg11: memref<1x128xf32, #tpu.memory_space<vmem>>, %arg12: memref<8x8x128xf32, #tpu.memory_space<vmem>>, %arg13: memref<8x8x128xf32, #tpu.memory_space<vmem>>, %arg14: memref<8x128xf32, #tpu.memory_space<vmem>>, %arg15: memref<8x8x384xf32, #tpu.memory_space<vmem>>) attributes {dimension_semantics = [#tpu.dimension_semantics<parallel>, #tpu.dimension_semantics<arbitrary>], iteration_bounds = array<i64: 1, 1>, scalar_prefetch = 0 : i64, scratch_operands = 2 : i64, tpu.core_type = #tpu.core_type<tc>, window_params = [{transform_indices = @transform_0, window_bounds = array<i64: 8, 8, 32>}, {transform_indices = @transform_1, window_bounds = array<i64: 8, 128>}, {pipeline_mode = #tpu.pipeline_mode<synchronous>, transform_indices = @transform_2, window_bounds = array<i64: 32, 128>}, {pipeline_mode = #tpu.pipeline_mode<synchronous>, transform_indices = @transform_3, window_bounds = array<i64: 1, 128>}, {pipeline_mode = #tpu.pipeline_mode<synchronous>, transform_indices = @transform_4, window_bounds = array<i64: 128, 384>}, {pipeline_mode = #tpu.pipeline_mode<synchronous>, transform_indices = @transform_5, window_bounds = array<i64: 1, 384>}, {pipeline_mode = #tpu.pipeline_mode<synchronous>, transform_indices = @transform_6, window_bounds = array<i64: 128, 384>}, {pipeline_mode = #tpu.pipeline_mode<synchronous>, transform_indices = @transform_7, window_bounds = array<i64: 1, 128>}, {pipeline_mode = #tpu.pipeline_mode<synchronous>, transform_indices = @transform_8, window_bounds = array<i64: 128, 128>}, {pipeline_mode = #tpu.pipeline_mode<synchronous>, transform_indices = @transform_9, window_bounds = array<i64: 1, 128>}, {transform_indices = @transform_10, window_bounds = array<i64: 8, 8, 128>}, {transform_indices = @transform_11, window_bounds = array<i64: 8, 8, 128>}]} {
    %c0_i32 = arith.constant 0 : i32
    %0 = arith.cmpi eq, %arg1, %c0_i32 : i32
    %1 = arith.extui %0 : i1 to i32
    %c0_i32_0 = arith.constant 0 : i32
    %2 = arith.cmpi ne, %1, %c0_i32_0 : i32
    scf.if %2 {
      %c0_100 = arith.constant 0 : index
      %c0_101 = arith.constant 0 : index
      %314 = vector.load %arg3[%c0_100, %c0_101] : memref<8x128xf32, #tpu.memory_space<vmem>>, vector<8x128xf32>
      %c0_102 = arith.constant 0 : index
      %c0_103 = arith.constant 0 : index
      %315 = vector.load %arg14[%c0_102, %c0_103] : memref<8x128xf32, #tpu.memory_space<vmem>>, vector<8x128xf32>
      tpu.vector_store %arg14[%c0_102, %c0_103], %314 {strides = array<i32>} : memref<8x128xf32, #tpu.memory_space<vmem>>, vector<8x128xf32>,
    } else {
    }
    %c0 = arith.constant 0 : index
    %c0_1 = arith.constant 0 : index
    %c0_2 = arith.constant 0 : index
    %3 = vector.load %arg2[%c0, %c0_1, %c0_2] : memref<8x8x32xf32, #tpu.memory_space<vmem>>, vector<8x8x32xf32>
    %4 = vector.shape_cast %3 : vector<8x8x32xf32> to vector<64x32xf32>
    %c0_3 = arith.constant 0 : index
    %c0_4 = arith.constant 0 : index
    %5 = vector.load %arg4[%c0_3, %c0_4] : memref<32x128xf32, #tpu.memory_space<vmem>>, vector<32x128xf32>
    %cst = arith.constant dense<0.000000e+00> : vector<64x128xf32>
    %6 = tpu.matmul %4, %5, %cst {dimension_numbers = #tpu.dot_dimension_numbers<[1], [0], [0], [1], [0, 0, 1, 1], [], []>} : vector<64x32xf32>, vector<32x128xf32>, vector<64x128xf32> -> vector<64x128xf32>
    %c0_5 = arith.constant 0 : index
    %c0_6 = arith.constant 0 : index
    %7 = vector.load %arg5[%c0_5, %c0_6] : memref<1x128xf32, #tpu.memory_space<vmem>>, vector<1x128xf32>
    %8 = vector.broadcast %7 : vector<1x128xf32> to vector<64x128xf32>
    %9 = arith.addf %6, %8 : vector<64x128xf32>
    %cst_7 = arith.constant 0.000000e+00 : f32
    %10 = vector.broadcast %cst_7 : f32 to vector<64x128xf32>
    %11 = arith.maximumf %9, %10 : vector<64x128xf32>
    %c0_8 = arith.constant 0 : index
    %c0_9 = arith.constant 0 : index
    %12 = vector.load %arg6[%c0_8, %c0_9] : memref<128x384xf32, #tpu.memory_space<vmem>>, vector<128x384xf32>
    %cst_10 = arith.constant dense<0.000000e+00> : vector<64x384xf32>
    %13 = tpu.matmul %11, %12, %cst_10 {dimension_numbers = #tpu.dot_dimension_numbers<[1], [0], [0], [1], [0, 0, 1, 1], [], []>} : vector<64x128xf32>, vector<128x384xf32>, vector<64x384xf32> -> vector<64x384xf32>
    %c0_11 = arith.constant 0 : index
    %c0_12 = arith.constant 0 : index
    %14 = vector.load %arg7[%c0_11, %c0_12] : memref<1x384xf32, #tpu.memory_space<vmem>>, vector<1x384xf32>
    %15 = vector.broadcast %14 : vector<1x384xf32> to vector<64x384xf32>
    %16 = arith.addf %13, %15 : vector<64x384xf32>
    %17 = vector.shape_cast %16 : vector<64x384xf32> to vector<8x8x384xf32>
    %c0_13 = arith.constant 0 : index
    %c0_14 = arith.constant 0 : index
    %c0_15 = arith.constant 0 : index
    %18 = vector.load %arg15[%c0_13, %c0_14, %c0_15] : memref<8x8x384xf32, #tpu.memory_space<vmem>>, vector<8x8x384xf32>
    tpu.vector_store %arg15[%c0_13, %c0_14, %c0_15], %17 {strides = array<i32>} : memref<8x8x384xf32, #tpu.memory_space<vmem>>, vector<8x8x384xf32>,
    %c0_16 = arith.constant 0 : index
    %c0_17 = arith.constant 0 : index
    %19 = vector.load %arg9[%c0_16, %c0_17] : memref<1x128xf32, #tpu.memory_space<vmem>>, vector<1x128xf32>
    %20 = vector.shape_cast %19 : vector<1x128xf32> to vector<1x128xf32>
    %21 = vector.broadcast %20 : vector<1x128xf32> to vector<8x128xf32>
    %c0_18 = arith.constant 0 : index
    %c0_19 = arith.constant 0 : index
    %22 = vector.load %arg8[%c0_18, %c0_19] : memref<128x384xf32, #tpu.memory_space<vmem>>, vector<128x384xf32>
    %c0_20 = arith.constant 0 : index
    %c0_21 = arith.constant 0 : index
    %23 = vector.load %arg14[%c0_20, %c0_21] : memref<8x128xf32, #tpu.memory_space<vmem>>, vector<8x128xf32>
    %c0_i32_22 = arith.constant 0 : i32
    %24 = arith.index_cast %c0_i32_22 : i32 to index
    %c0_23 = arith.constant 0 : index
    %c0_24 = arith.constant 0 : index
    %25 = vector.load %arg15[%24, %c0_23, %c0_24] : memref<8x8x384xf32, #tpu.memory_space<vmem>>, vector<1x8x384xf32>
    %26 = vector.shape_cast %25 : vector<1x8x384xf32> to vector<8x384xf32>
    %cst_25 = arith.constant dense<0.000000e+00> : vector<8x384xf32>
    %27 = tpu.matmul %23, %22, %cst_25 {dimension_numbers = #tpu.dot_dimension_numbers<[1], [0], [0], [1], [0, 0, 1, 1], [], []>} : vector<8x128xf32>, vector<128x384xf32>, vector<8x384xf32> -> vector<8x384xf32>
    %28 = vector.extract_strided_slice %26 {offsets = [0, 0], sizes = [8, 128], strides = [1, 1]} : vector<8x384xf32> to vector<8x128xf32>
    %29 = vector.extract_strided_slice %27 {offsets = [0, 0], sizes = [8, 128], strides = [1, 1]} : vector<8x384xf32> to vector<8x128xf32>
    %30 = arith.addf %28, %29 : vector<8x128xf32>
    %31 = arith.negf %30 : vector<8x128xf32>
    %32 = math.exp %31 : vector<8x128xf32>
    %cst_26 = arith.constant 1.000000e+00 : f32
    %33 = vector.broadcast %cst_26 : f32 to vector<8x128xf32>
    %34 = arith.addf %33, %32 : vector<8x128xf32>
    %35 = arith.divf %33, %34 : vector<8x128xf32>
    %36 = vector.extract_strided_slice %26 {offsets = [0, 128], sizes = [8, 128], strides = [1, 1]} : vector<8x384xf32> to vector<8x128xf32>
    %37 = vector.extract_strided_slice %27 {offsets = [0, 128], sizes = [8, 128], strides = [1, 1]} : vector<8x384xf32> to vector<8x128xf32>
    %38 = arith.addf %36, %37 : vector<8x128xf32>
    %39 = arith.negf %38 : vector<8x128xf32>
    %40 = math.exp %39 : vector<8x128xf32>
    %cst_27 = arith.constant 1.000000e+00 : f32
    %41 = vector.broadcast %cst_27 : f32 to vector<8x128xf32>
    %42 = arith.addf %41, %40 : vector<8x128xf32>
    %43 = arith.divf %41, %42 : vector<8x128xf32>
    %44 = vector.extract_strided_slice %26 {offsets = [0, 256], sizes = [8, 128], strides = [1, 1]} : vector<8x384xf32> to vector<8x128xf32>
    %45 = vector.extract_strided_slice %27 {offsets = [0, 256], sizes = [8, 128], strides = [1, 1]} : vector<8x384xf32> to vector<8x128xf32>
    %46 = arith.addf %45, %21 : vector<8x128xf32>
    %47 = arith.mulf %35, %46 : vector<8x128xf32>
    %48 = arith.addf %44, %47 : vector<8x128xf32>
    %49 = math.tanh %48 : vector<8x128xf32>
    %cst_28 = arith.constant 1.000000e+00 : f32
    %50 = vector.broadcast %cst_28 : f32 to vector<8x128xf32>
    %51 = arith.subf %50, %43 : vector<8x128xf32>
    %52 = arith.mulf %51, %49 : vector<8x128xf32>
    %53 = arith.mulf %43, %23 : vector<8x128xf32>
    %54 = arith.addf %52, %53 : vector<8x128xf32>
    %55 = arith.index_cast %c0_i32_22 : i32 to index
    %c0_29 = arith.constant 0 : index
    %c0_30 = arith.constant 0 : index
    %56 = vector.load %arg13[%55, %c0_29, %c0_30] : memref<8x8x128xf32, #tpu.memory_space<vmem>>, vector<1x8x128xf32>
    %57 = vector.shape_cast %56 : vector<1x8x128xf32> to vector<8x128xf32>
    %58 = vector.shape_cast %54 : vector<8x128xf32> to vector<1x8x128xf32>
    tpu.vector_store %arg13[%55, %c0_29, %c0_30], %58 {strides = array<i32>} : memref<8x8x128xf32, #tpu.memory_space<vmem>>, vector<1x8x128xf32>,
    %c1_i32 = arith.constant 1 : i32
    %59 = arith.index_cast %c1_i32 : i32 to index
    %c0_31 = arith.constant 0 : index
    %c0_32 = arith.constant 0 : index
    %60 = vector.load %arg15[%59, %c0_31, %c0_32] : memref<8x8x384xf32, #tpu.memory_space<vmem>>, vector<1x8x384xf32>
    %61 = vector.shape_cast %60 : vector<1x8x384xf32> to vector<8x384xf32>
    %cst_33 = arith.constant dense<0.000000e+00> : vector<8x384xf32>
    %62 = tpu.matmul %54, %22, %cst_33 {dimension_numbers = #tpu.dot_dimension_numbers<[1], [0], [0], [1], [0, 0, 1, 1], [], []>} : vector<8x128xf32>, vector<128x384xf32>, vector<8x384xf32> -> vector<8x384xf32>
    %63 = vector.extract_strided_slice %61 {offsets = [0, 0], sizes = [8, 128], strides = [1, 1]} : vector<8x384xf32> to vector<8x128xf32>
    %64 = vector.extract_strided_slice %62 {offsets = [0, 0], sizes = [8, 128], strides = [1, 1]} : vector<8x384xf32> to vector<8x128xf32>
    %65 = arith.addf %63, %64 : vector<8x128xf32>
    %66 = arith.negf %65 : vector<8x128xf32>
    %67 = math.exp %66 : vector<8x128xf32>
    %cst_34 = arith.constant 1.000000e+00 : f32
    %68 = vector.broadcast %cst_34 : f32 to vector<8x128xf32>
    %69 = arith.addf %68, %67 : vector<8x128xf32>
    %70 = arith.divf %68, %69 : vector<8x128xf32>
    %71 = vector.extract_strided_slice %61 {offsets = [0, 128], sizes = [8, 128], strides = [1, 1]} : vector<8x384xf32> to vector<8x128xf32>
    %72 = vector.extract_strided_slice %62 {offsets = [0, 128], sizes = [8, 128], strides = [1, 1]} : vector<8x384xf32> to vector<8x128xf32>
    %73 = arith.addf %71, %72 : vector<8x128xf32>
    %74 = arith.negf %73 : vector<8x128xf32>
    %75 = math.exp %74 : vector<8x128xf32>
    %cst_35 = arith.constant 1.000000e+00 : f32
    %76 = vector.broadcast %cst_35 : f32 to vector<8x128xf32>
    %77 = arith.addf %76, %75 : vector<8x128xf32>
    %78 = arith.divf %76, %77 : vector<8x128xf32>
    %79 = vector.extract_strided_slice %61 {offsets = [0, 256], sizes = [8, 128], strides = [1, 1]} : vector<8x384xf32> to vector<8x128xf32>
    %80 = vector.extract_strided_slice %62 {offsets = [0, 256], sizes = [8, 128], strides = [1, 1]} : vector<8x384xf32> to vector<8x128xf32>
    %81 = arith.addf %80, %21 : vector<8x128xf32>
    %82 = arith.mulf %70, %81 : vector<8x128xf32>
    %83 = arith.addf %79, %82 : vector<8x128xf32>
    %84 = math.tanh %83 : vector<8x128xf32>
    %cst_36 = arith.constant 1.000000e+00 : f32
    %85 = vector.broadcast %cst_36 : f32 to vector<8x128xf32>
    %86 = arith.subf %85, %78 : vector<8x128xf32>
    %87 = arith.mulf %86, %84 : vector<8x128xf32>
    %88 = arith.mulf %78, %54 : vector<8x128xf32>
    %89 = arith.addf %87, %88 : vector<8x128xf32>
    %90 = arith.index_cast %c1_i32 : i32 to index
    %c0_37 = arith.constant 0 : index
    %c0_38 = arith.constant 0 : index
    %91 = vector.load %arg13[%90, %c0_37, %c0_38] : memref<8x8x128xf32, #tpu.memory_space<vmem>>, vector<1x8x128xf32>
    %92 = vector.shape_cast %91 : vector<1x8x128xf32> to vector<8x128xf32>
    %93 = vector.shape_cast %89 : vector<8x128xf32> to vector<1x8x128xf32>
    tpu.vector_store %arg13[%90, %c0_37, %c0_38], %93 {strides = array<i32>} : memref<8x8x128xf32, #tpu.memory_space<vmem>>, vector<1x8x128xf32>,
    %c2_i32 = arith.constant 2 : i32
    %94 = arith.index_cast %c2_i32 : i32 to index
    %c0_39 = arith.constant 0 : index
    %c0_40 = arith.constant 0 : index
    %95 = vector.load %arg15[%94, %c0_39, %c0_40] : memref<8x8x384xf32, #tpu.memory_space<vmem>>, vector<1x8x384xf32>
    %96 = vector.shape_cast %95 : vector<1x8x384xf32> to vector<8x384xf32>
    %cst_41 = arith.constant dense<0.000000e+00> : vector<8x384xf32>
    %97 = tpu.matmul %89, %22, %cst_41 {dimension_numbers = #tpu.dot_dimension_numbers<[1], [0], [0], [1], [0, 0, 1, 1], [], []>} : vector<8x128xf32>, vector<128x384xf32>, vector<8x384xf32> -> vector<8x384xf32>
    %98 = vector.extract_strided_slice %96 {offsets = [0, 0], sizes = [8, 128], strides = [1, 1]} : vector<8x384xf32> to vector<8x128xf32>
    %99 = vector.extract_strided_slice %97 {offsets = [0, 0], sizes = [8, 128], strides = [1, 1]} : vector<8x384xf32> to vector<8x128xf32>
    %100 = arith.addf %98, %99 : vector<8x128xf32>
    %101 = arith.negf %100 : vector<8x128xf32>
    %102 = math.exp %101 : vector<8x128xf32>
    %cst_42 = arith.constant 1.000000e+00 : f32
    %103 = vector.broadcast %cst_42 : f32 to vector<8x128xf32>
    %104 = arith.addf %103, %102 : vector<8x128xf32>
    %105 = arith.divf %103, %104 : vector<8x128xf32>
    %106 = vector.extract_strided_slice %96 {offsets = [0, 128], sizes = [8, 128], strides = [1, 1]} : vector<8x384xf32> to vector<8x128xf32>
    %107 = vector.extract_strided_slice %97 {offsets = [0, 128], sizes = [8, 128], strides = [1, 1]} : vector<8x384xf32> to vector<8x128xf32>
    %108 = arith.addf %106, %107 : vector<8x128xf32>
    %109 = arith.negf %108 : vector<8x128xf32>
    %110 = math.exp %109 : vector<8x128xf32>
    %cst_43 = arith.constant 1.000000e+00 : f32
    %111 = vector.broadcast %cst_43 : f32 to vector<8x128xf32>
    %112 = arith.addf %111, %110 : vector<8x128xf32>
    %113 = arith.divf %111, %112 : vector<8x128xf32>
    %114 = vector.extract_strided_slice %96 {offsets = [0, 256], sizes = [8, 128], strides = [1, 1]} : vector<8x384xf32> to vector<8x128xf32>
    %115 = vector.extract_strided_slice %97 {offsets = [0, 256], sizes = [8, 128], strides = [1, 1]} : vector<8x384xf32> to vector<8x128xf32>
    %116 = arith.addf %115, %21 : vector<8x128xf32>
    %117 = arith.mulf %105, %116 : vector<8x128xf32>
    %118 = arith.addf %114, %117 : vector<8x128xf32>
    %119 = math.tanh %118 : vector<8x128xf32>
    %cst_44 = arith.constant 1.000000e+00 : f32
    %120 = vector.broadcast %cst_44 : f32 to vector<8x128xf32>
    %121 = arith.subf %120, %113 : vector<8x128xf32>
    %122 = arith.mulf %121, %119 : vector<8x128xf32>
    %123 = arith.mulf %113, %89 : vector<8x128xf32>
    %124 = arith.addf %122, %123 : vector<8x128xf32>
    %125 = arith.index_cast %c2_i32 : i32 to index
    %c0_45 = arith.constant 0 : index
    %c0_46 = arith.constant 0 : index
    %126 = vector.load %arg13[%125, %c0_45, %c0_46] : memref<8x8x128xf32, #tpu.memory_space<vmem>>, vector<1x8x128xf32>
    %127 = vector.shape_cast %126 : vector<1x8x128xf32> to vector<8x128xf32>
    %128 = vector.shape_cast %124 : vector<8x128xf32> to vector<1x8x128xf32>
    tpu.vector_store %arg13[%125, %c0_45, %c0_46], %128 {strides = array<i32>} : memref<8x8x128xf32, #tpu.memory_space<vmem>>, vector<1x8x128xf32>,
    %c3_i32 = arith.constant 3 : i32
    %129 = arith.index_cast %c3_i32 : i32 to index
    %c0_47 = arith.constant 0 : index
    %c0_48 = arith.constant 0 : index
    %130 = vector.load %arg15[%129, %c0_47, %c0_48] : memref<8x8x384xf32, #tpu.memory_space<vmem>>, vector<1x8x384xf32>
    %131 = vector.shape_cast %130 : vector<1x8x384xf32> to vector<8x384xf32>
    %cst_49 = arith.constant dense<0.000000e+00> : vector<8x384xf32>
    %132 = tpu.matmul %124, %22, %cst_49 {dimension_numbers = #tpu.dot_dimension_numbers<[1], [0], [0], [1], [0, 0, 1, 1], [], []>} : vector<8x128xf32>, vector<128x384xf32>, vector<8x384xf32> -> vector<8x384xf32>
    %133 = vector.extract_strided_slice %131 {offsets = [0, 0], sizes = [8, 128], strides = [1, 1]} : vector<8x384xf32> to vector<8x128xf32>
    %134 = vector.extract_strided_slice %132 {offsets = [0, 0], sizes = [8, 128], strides = [1, 1]} : vector<8x384xf32> to vector<8x128xf32>
    %135 = arith.addf %133, %134 : vector<8x128xf32>
    %136 = arith.negf %135 : vector<8x128xf32>
    %137 = math.exp %136 : vector<8x128xf32>
    %cst_50 = arith.constant 1.000000e+00 : f32
    %138 = vector.broadcast %cst_50 : f32 to vector<8x128xf32>
    %139 = arith.addf %138, %137 : vector<8x128xf32>
    %140 = arith.divf %138, %139 : vector<8x128xf32>
    %141 = vector.extract_strided_slice %131 {offsets = [0, 128], sizes = [8, 128], strides = [1, 1]} : vector<8x384xf32> to vector<8x128xf32>
    %142 = vector.extract_strided_slice %132 {offsets = [0, 128], sizes = [8, 128], strides = [1, 1]} : vector<8x384xf32> to vector<8x128xf32>
    %143 = arith.addf %141, %142 : vector<8x128xf32>
    %144 = arith.negf %143 : vector<8x128xf32>
    %145 = math.exp %144 : vector<8x128xf32>
    %cst_51 = arith.constant 1.000000e+00 : f32
    %146 = vector.broadcast %cst_51 : f32 to vector<8x128xf32>
    %147 = arith.addf %146, %145 : vector<8x128xf32>
    %148 = arith.divf %146, %147 : vector<8x128xf32>
    %149 = vector.extract_strided_slice %131 {offsets = [0, 256], sizes = [8, 128], strides = [1, 1]} : vector<8x384xf32> to vector<8x128xf32>
    %150 = vector.extract_strided_slice %132 {offsets = [0, 256], sizes = [8, 128], strides = [1, 1]} : vector<8x384xf32> to vector<8x128xf32>
    %151 = arith.addf %150, %21 : vector<8x128xf32>
    %152 = arith.mulf %140, %151 : vector<8x128xf32>
    %153 = arith.addf %149, %152 : vector<8x128xf32>
    %154 = math.tanh %153 : vector<8x128xf32>
    %cst_52 = arith.constant 1.000000e+00 : f32
    %155 = vector.broadcast %cst_52 : f32 to vector<8x128xf32>
    %156 = arith.subf %155, %148 : vector<8x128xf32>
    %157 = arith.mulf %156, %154 : vector<8x128xf32>
    %158 = arith.mulf %148, %124 : vector<8x128xf32>
    %159 = arith.addf %157, %158 : vector<8x128xf32>
    %160 = arith.index_cast %c3_i32 : i32 to index
    %c0_53 = arith.constant 0 : index
    %c0_54 = arith.constant 0 : index
    %161 = vector.load %arg13[%160, %c0_53, %c0_54] : memref<8x8x128xf32, #tpu.memory_space<vmem>>, vector<1x8x128xf32>
    %162 = vector.shape_cast %161 : vector<1x8x128xf32> to vector<8x128xf32>
    %163 = vector.shape_cast %159 : vector<8x128xf32> to vector<1x8x128xf32>
    tpu.vector_store %arg13[%160, %c0_53, %c0_54], %163 {strides = array<i32>} : memref<8x8x128xf32, #tpu.memory_space<vmem>>, vector<1x8x128xf32>,
    %c4_i32 = arith.constant 4 : i32
    %164 = arith.index_cast %c4_i32 : i32 to index
    %c0_55 = arith.constant 0 : index
    %c0_56 = arith.constant 0 : index
    %165 = vector.load %arg15[%164, %c0_55, %c0_56] : memref<8x8x384xf32, #tpu.memory_space<vmem>>, vector<1x8x384xf32>
    %166 = vector.shape_cast %165 : vector<1x8x384xf32> to vector<8x384xf32>
    %cst_57 = arith.constant dense<0.000000e+00> : vector<8x384xf32>
    %167 = tpu.matmul %159, %22, %cst_57 {dimension_numbers = #tpu.dot_dimension_numbers<[1], [0], [0], [1], [0, 0, 1, 1], [], []>} : vector<8x128xf32>, vector<128x384xf32>, vector<8x384xf32> -> vector<8x384xf32>
    %168 = vector.extract_strided_slice %166 {offsets = [0, 0], sizes = [8, 128], strides = [1, 1]} : vector<8x384xf32> to vector<8x128xf32>
    %169 = vector.extract_strided_slice %167 {offsets = [0, 0], sizes = [8, 128], strides = [1, 1]} : vector<8x384xf32> to vector<8x128xf32>
    %170 = arith.addf %168, %169 : vector<8x128xf32>
    %171 = arith.negf %170 : vector<8x128xf32>
    %172 = math.exp %171 : vector<8x128xf32>
    %cst_58 = arith.constant 1.000000e+00 : f32
    %173 = vector.broadcast %cst_58 : f32 to vector<8x128xf32>
    %174 = arith.addf %173, %172 : vector<8x128xf32>
    %175 = arith.divf %173, %174 : vector<8x128xf32>
    %176 = vector.extract_strided_slice %166 {offsets = [0, 128], sizes = [8, 128], strides = [1, 1]} : vector<8x384xf32> to vector<8x128xf32>
    %177 = vector.extract_strided_slice %167 {offsets = [0, 128], sizes = [8, 128], strides = [1, 1]} : vector<8x384xf32> to vector<8x128xf32>
    %178 = arith.addf %176, %177 : vector<8x128xf32>
    %179 = arith.negf %178 : vector<8x128xf32>
    %180 = math.exp %179 : vector<8x128xf32>
    %cst_59 = arith.constant 1.000000e+00 : f32
    %181 = vector.broadcast %cst_59 : f32 to vector<8x128xf32>
    %182 = arith.addf %181, %180 : vector<8x128xf32>
    %183 = arith.divf %181, %182 : vector<8x128xf32>
    %184 = vector.extract_strided_slice %166 {offsets = [0, 256], sizes = [8, 128], strides = [1, 1]} : vector<8x384xf32> to vector<8x128xf32>
    %185 = vector.extract_strided_slice %167 {offsets = [0, 256], sizes = [8, 128], strides = [1, 1]} : vector<8x384xf32> to vector<8x128xf32>
    %186 = arith.addf %185, %21 : vector<8x128xf32>
    %187 = arith.mulf %175, %186 : vector<8x128xf32>
    %188 = arith.addf %184, %187 : vector<8x128xf32>
    %189 = math.tanh %188 : vector<8x128xf32>
    %cst_60 = arith.constant 1.000000e+00 : f32
    %190 = vector.broadcast %cst_60 : f32 to vector<8x128xf32>
    %191 = arith.subf %190, %183 : vector<8x128xf32>
    %192 = arith.mulf %191, %189 : vector<8x128xf32>
    %193 = arith.mulf %183, %159 : vector<8x128xf32>
    %194 = arith.addf %192, %193 : vector<8x128xf32>
    %195 = arith.index_cast %c4_i32 : i32 to index
    %c0_61 = arith.constant 0 : index
    %c0_62 = arith.constant 0 : index
    %196 = vector.load %arg13[%195, %c0_61, %c0_62] : memref<8x8x128xf32, #tpu.memory_space<vmem>>, vector<1x8x128xf32>
    %197 = vector.shape_cast %196 : vector<1x8x128xf32> to vector<8x128xf32>
    %198 = vector.shape_cast %194 : vector<8x128xf32> to vector<1x8x128xf32>
    tpu.vector_store %arg13[%195, %c0_61, %c0_62], %198 {strides = array<i32>} : memref<8x8x128xf32, #tpu.memory_space<vmem>>, vector<1x8x128xf32>,
    %c5_i32 = arith.constant 5 : i32
    %199 = arith.index_cast %c5_i32 : i32 to index
    %c0_63 = arith.constant 0 : index
    %c0_64 = arith.constant 0 : index
    %200 = vector.load %arg15[%199, %c0_63, %c0_64] : memref<8x8x384xf32, #tpu.memory_space<vmem>>, vector<1x8x384xf32>
    %201 = vector.shape_cast %200 : vector<1x8x384xf32> to vector<8x384xf32>
    %cst_65 = arith.constant dense<0.000000e+00> : vector<8x384xf32>
    %202 = tpu.matmul %194, %22, %cst_65 {dimension_numbers = #tpu.dot_dimension_numbers<[1], [0], [0], [1], [0, 0, 1, 1], [], []>} : vector<8x128xf32>, vector<128x384xf32>, vector<8x384xf32> -> vector<8x384xf32>
    %203 = vector.extract_strided_slice %201 {offsets = [0, 0], sizes = [8, 128], strides = [1, 1]} : vector<8x384xf32> to vector<8x128xf32>
    %204 = vector.extract_strided_slice %202 {offsets = [0, 0], sizes = [8, 128], strides = [1, 1]} : vector<8x384xf32> to vector<8x128xf32>
    %205 = arith.addf %203, %204 : vector<8x128xf32>
    %206 = arith.negf %205 : vector<8x128xf32>
    %207 = math.exp %206 : vector<8x128xf32>
    %cst_66 = arith.constant 1.000000e+00 : f32
    %208 = vector.broadcast %cst_66 : f32 to vector<8x128xf32>
    %209 = arith.addf %208, %207 : vector<8x128xf32>
    %210 = arith.divf %208, %209 : vector<8x128xf32>
    %211 = vector.extract_strided_slice %201 {offsets = [0, 128], sizes = [8, 128], strides = [1, 1]} : vector<8x384xf32> to vector<8x128xf32>
    %212 = vector.extract_strided_slice %202 {offsets = [0, 128], sizes = [8, 128], strides = [1, 1]} : vector<8x384xf32> to vector<8x128xf32>
    %213 = arith.addf %211, %212 : vector<8x128xf32>
    %214 = arith.negf %213 : vector<8x128xf32>
    %215 = math.exp %214 : vector<8x128xf32>
    %cst_67 = arith.constant 1.000000e+00 : f32
    %216 = vector.broadcast %cst_67 : f32 to vector<8x128xf32>
    %217 = arith.addf %216, %215 : vector<8x128xf32>
    %218 = arith.divf %216, %217 : vector<8x128xf32>
    %219 = vector.extract_strided_slice %201 {offsets = [0, 256], sizes = [8, 128], strides = [1, 1]} : vector<8x384xf32> to vector<8x128xf32>
    %220 = vector.extract_strided_slice %202 {offsets = [0, 256], sizes = [8, 128], strides = [1, 1]} : vector<8x384xf32> to vector<8x128xf32>
    %221 = arith.addf %220, %21 : vector<8x128xf32>
    %222 = arith.mulf %210, %221 : vector<8x128xf32>
    %223 = arith.addf %219, %222 : vector<8x128xf32>
    %224 = math.tanh %223 : vector<8x128xf32>
    %cst_68 = arith.constant 1.000000e+00 : f32
    %225 = vector.broadcast %cst_68 : f32 to vector<8x128xf32>
    %226 = arith.subf %225, %218 : vector<8x128xf32>
    %227 = arith.mulf %226, %224 : vector<8x128xf32>
    %228 = arith.mulf %218, %194 : vector<8x128xf32>
    %229 = arith.addf %227, %228 : vector<8x128xf32>
    %230 = arith.index_cast %c5_i32 : i32 to index
    %c0_69 = arith.constant 0 : index
    %c0_70 = arith.constant 0 : index
    %231 = vector.load %arg13[%230, %c0_69, %c0_70] : memref<8x8x128xf32, #tpu.memory_space<vmem>>, vector<1x8x128xf32>
    %232 = vector.shape_cast %231 : vector<1x8x128xf32> to vector<8x128xf32>
    %233 = vector.shape_cast %229 : vector<8x128xf32> to vector<1x8x128xf32>
    tpu.vector_store %arg13[%230, %c0_69, %c0_70], %233 {strides = array<i32>} : memref<8x8x128xf32, #tpu.memory_space<vmem>>, vector<1x8x128xf32>,
    %c6_i32 = arith.constant 6 : i32
    %234 = arith.index_cast %c6_i32 : i32 to index
    %c0_71 = arith.constant 0 : index
    %c0_72 = arith.constant 0 : index
    %235 = vector.load %arg15[%234, %c0_71, %c0_72] : memref<8x8x384xf32, #tpu.memory_space<vmem>>, vector<1x8x384xf32>
    %236 = vector.shape_cast %235 : vector<1x8x384xf32> to vector<8x384xf32>
    %cst_73 = arith.constant dense<0.000000e+00> : vector<8x384xf32>
    %237 = tpu.matmul %229, %22, %cst_73 {dimension_numbers = #tpu.dot_dimension_numbers<[1], [0], [0], [1], [0, 0, 1, 1], [], []>} : vector<8x128xf32>, vector<128x384xf32>, vector<8x384xf32> -> vector<8x384xf32>
    %238 = vector.extract_strided_slice %236 {offsets = [0, 0], sizes = [8, 128], strides = [1, 1]} : vector<8x384xf32> to vector<8x128xf32>
    %239 = vector.extract_strided_slice %237 {offsets = [0, 0], sizes = [8, 128], strides = [1, 1]} : vector<8x384xf32> to vector<8x128xf32>
    %240 = arith.addf %238, %239 : vector<8x128xf32>
    %241 = arith.negf %240 : vector<8x128xf32>
    %242 = math.exp %241 : vector<8x128xf32>
    %cst_74 = arith.constant 1.000000e+00 : f32
    %243 = vector.broadcast %cst_74 : f32 to vector<8x128xf32>
    %244 = arith.addf %243, %242 : vector<8x128xf32>
    %245 = arith.divf %243, %244 : vector<8x128xf32>
    %246 = vector.extract_strided_slice %236 {offsets = [0, 128], sizes = [8, 128], strides = [1, 1]} : vector<8x384xf32> to vector<8x128xf32>
    %247 = vector.extract_strided_slice %237 {offsets = [0, 128], sizes = [8, 128], strides = [1, 1]} : vector<8x384xf32> to vector<8x128xf32>
    %248 = arith.addf %246, %247 : vector<8x128xf32>
    %249 = arith.negf %248 : vector<8x128xf32>
    %250 = math.exp %249 : vector<8x128xf32>
    %cst_75 = arith.constant 1.000000e+00 : f32
    %251 = vector.broadcast %cst_75 : f32 to vector<8x128xf32>
    %252 = arith.addf %251, %250 : vector<8x128xf32>
    %253 = arith.divf %251, %252 : vector<8x128xf32>
    %254 = vector.extract_strided_slice %236 {offsets = [0, 256], sizes = [8, 128], strides = [1, 1]} : vector<8x384xf32> to vector<8x128xf32>
    %255 = vector.extract_strided_slice %237 {offsets = [0, 256], sizes = [8, 128], strides = [1, 1]} : vector<8x384xf32> to vector<8x128xf32>
    %256 = arith.addf %255, %21 : vector<8x128xf32>
    %257 = arith.mulf %245, %256 : vector<8x128xf32>
    %258 = arith.addf %254, %257 : vector<8x128xf32>
    %259 = math.tanh %258 : vector<8x128xf32>
    %cst_76 = arith.constant 1.000000e+00 : f32
    %260 = vector.broadcast %cst_76 : f32 to vector<8x128xf32>
    %261 = arith.subf %260, %253 : vector<8x128xf32>
    %262 = arith.mulf %261, %259 : vector<8x128xf32>
    %263 = arith.mulf %253, %229 : vector<8x128xf32>
    %264 = arith.addf %262, %263 : vector<8x128xf32>
    %265 = arith.index_cast %c6_i32 : i32 to index
    %c0_77 = arith.constant 0 : index
    %c0_78 = arith.constant 0 : index
    %266 = vector.load %arg13[%265, %c0_77, %c0_78] : memref<8x8x128xf32, #tpu.memory_space<vmem>>, vector<1x8x128xf32>
    %267 = vector.shape_cast %266 : vector<1x8x128xf32> to vector<8x128xf32>
    %268 = vector.shape_cast %264 : vector<8x128xf32> to vector<1x8x128xf32>
    tpu.vector_store %arg13[%265, %c0_77, %c0_78], %268 {strides = array<i32>} : memref<8x8x128xf32, #tpu.memory_space<vmem>>, vector<1x8x128xf32>,
    %c7_i32 = arith.constant 7 : i32
    %269 = arith.index_cast %c7_i32 : i32 to index
    %c0_79 = arith.constant 0 : index
    %c0_80 = arith.constant 0 : index
    %270 = vector.load %arg15[%269, %c0_79, %c0_80] : memref<8x8x384xf32, #tpu.memory_space<vmem>>, vector<1x8x384xf32>
    %271 = vector.shape_cast %270 : vector<1x8x384xf32> to vector<8x384xf32>
    %cst_81 = arith.constant dense<0.000000e+00> : vector<8x384xf32>
    %272 = tpu.matmul %264, %22, %cst_81 {dimension_numbers = #tpu.dot_dimension_numbers<[1], [0], [0], [1], [0, 0, 1, 1], [], []>} : vector<8x128xf32>, vector<128x384xf32>, vector<8x384xf32> -> vector<8x384xf32>
    %273 = vector.extract_strided_slice %271 {offsets = [0, 0], sizes = [8, 128], strides = [1, 1]} : vector<8x384xf32> to vector<8x128xf32>
    %274 = vector.extract_strided_slice %272 {offsets = [0, 0], sizes = [8, 128], strides = [1, 1]} : vector<8x384xf32> to vector<8x128xf32>
    %275 = arith.addf %273, %274 : vector<8x128xf32>
    %276 = arith.negf %275 : vector<8x128xf32>
    %277 = math.exp %276 : vector<8x128xf32>
    %cst_82 = arith.constant 1.000000e+00 : f32
    %278 = vector.broadcast %cst_82 : f32 to vector<8x128xf32>
    %279 = arith.addf %278, %277 : vector<8x128xf32>
    %280 = arith.divf %278, %279 : vector<8x128xf32>
    %281 = vector.extract_strided_slice %271 {offsets = [0, 128], sizes = [8, 128], strides = [1, 1]} : vector<8x384xf32> to vector<8x128xf32>
    %282 = vector.extract_strided_slice %272 {offsets = [0, 128], sizes = [8, 128], strides = [1, 1]} : vector<8x384xf32> to vector<8x128xf32>
    %283 = arith.addf %281, %282 : vector<8x128xf32>
    %284 = arith.negf %283 : vector<8x128xf32>
    %285 = math.exp %284 : vector<8x128xf32>
    %cst_83 = arith.constant 1.000000e+00 : f32
    %286 = vector.broadcast %cst_83 : f32 to vector<8x128xf32>
    %287 = arith.addf %286, %285 : vector<8x128xf32>
    %288 = arith.divf %286, %287 : vector<8x128xf32>
    %289 = vector.extract_strided_slice %271 {offsets = [0, 256], sizes = [8, 128], strides = [1, 1]} : vector<8x384xf32> to vector<8x128xf32>
    %290 = vector.extract_strided_slice %272 {offsets = [0, 256], sizes = [8, 128], strides = [1, 1]} : vector<8x384xf32> to vector<8x128xf32>
    %291 = arith.addf %290, %21 : vector<8x128xf32>
    %292 = arith.mulf %280, %291 : vector<8x128xf32>
    %293 = arith.addf %289, %292 : vector<8x128xf32>
    %294 = math.tanh %293 : vector<8x128xf32>
    %cst_84 = arith.constant 1.000000e+00 : f32
    %295 = vector.broadcast %cst_84 : f32 to vector<8x128xf32>
    %296 = arith.subf %295, %288 : vector<8x128xf32>
    %297 = arith.mulf %296, %294 : vector<8x128xf32>
    %298 = arith.mulf %288, %264 : vector<8x128xf32>
    %299 = arith.addf %297, %298 : vector<8x128xf32>
    %300 = arith.index_cast %c7_i32 : i32 to index
    %c0_85 = arith.constant 0 : index
    %c0_86 = arith.constant 0 : index
    %301 = vector.load %arg13[%300, %c0_85, %c0_86] : memref<8x8x128xf32, #tpu.memory_space<vmem>>, vector<1x8x128xf32>
    %302 = vector.shape_cast %301 : vector<1x8x128xf32> to vector<8x128xf32>
    %303 = vector.shape_cast %299 : vector<8x128xf32> to vector<1x8x128xf32>
    tpu.vector_store %arg13[%300, %c0_85, %c0_86], %303 {strides = array<i32>} : memref<8x8x128xf32, #tpu.memory_space<vmem>>, vector<1x8x128xf32>,
    %c8_i32 = arith.constant 8 : i32
    %c0_87 = arith.constant 0 : index
    %c0_88 = arith.constant 0 : index
    %304 = vector.load %arg14[%c0_87, %c0_88] : memref<8x128xf32, #tpu.memory_space<vmem>>, vector<8x128xf32>
    tpu.vector_store %arg14[%c0_87, %c0_88], %299 {strides = array<i32>} : memref<8x128xf32, #tpu.memory_space<vmem>>, vector<8x128xf32>,
    %c0_89 = arith.constant 0 : index
    %c0_90 = arith.constant 0 : index
    %c0_91 = arith.constant 0 : index
    %305 = vector.load %arg13[%c0_89, %c0_90, %c0_91] : memref<8x8x128xf32, #tpu.memory_space<vmem>>, vector<8x8x128xf32>
    %306 = vector.shape_cast %305 : vector<8x8x128xf32> to vector<64x128xf32>
    %c0_92 = arith.constant 0 : index
    %c0_93 = arith.constant 0 : index
    %307 = vector.load %arg10[%c0_92, %c0_93] : memref<128x128xf32, #tpu.memory_space<vmem>>, vector<128x128xf32>
    %cst_94 = arith.constant dense<0.000000e+00> : vector<64x128xf32>
    %308 = tpu.matmul %306, %307, %cst_94 {dimension_numbers = #tpu.dot_dimension_numbers<[1], [0], [0], [1], [0, 0, 1, 1], [], []>} : vector<64x128xf32>, vector<128x128xf32>, vector<64x128xf32> -> vector<64x128xf32>
    %c0_95 = arith.constant 0 : index
    %c0_96 = arith.constant 0 : index
    %309 = vector.load %arg11[%c0_95, %c0_96] : memref<1x128xf32, #tpu.memory_space<vmem>>, vector<1x128xf32>
    %310 = vector.broadcast %309 : vector<1x128xf32> to vector<64x128xf32>
    %311 = arith.addf %308, %310 : vector<64x128xf32>
    %312 = vector.shape_cast %311 : vector<64x128xf32> to vector<8x8x128xf32>
    %c0_97 = arith.constant 0 : index
    %c0_98 = arith.constant 0 : index
    %c0_99 = arith.constant 0 : index
    %313 = vector.load %arg12[%c0_97, %c0_98, %c0_99] : memref<8x8x128xf32, #tpu.memory_space<vmem>>, vector<8x8x128xf32>
    tpu.vector_store %arg12[%c0_97, %c0_98, %c0_99], %312 {strides = array<i32>} : memref<8x8x128xf32, #tpu.memory_space<vmem>>, vector<8x8x128xf32>,
    return
  }
  func.func @transform_0(%arg0: i32, %arg1: i32) -> (i32, i32, i32) {
    %c0_i32 = arith.constant 0 : i32
    %c0_i32_0 = arith.constant 0 : i32
    return %arg1, %arg0, %c0_i32 : i32, i32, i32
  }
  func.func @transform_1(%arg0: i32, %arg1: i32) -> (i32, i32) {
    %c0_i32 = arith.constant 0 : i32
    %c0_i32_0 = arith.constant 0 : i32
    return %arg0, %c0_i32 : i32, i32
  }
  func.func @transform_2(%arg0: i32, %arg1: i32) -> (i32, i32) {
    %c0_i32 = arith.constant 0 : i32
    %c0_i32_0 = arith.constant 0 : i32
    %c0_i32_1 = arith.constant 0 : i32
    return %c0_i32, %c0_i32_0 : i32, i32
  }
  func.func @transform_3(%arg0: i32, %arg1: i32) -> (i32, i32) {
    %c0_i32 = arith.constant 0 : i32
    %c0_i32_0 = arith.constant 0 : i32
    %c0_i32_1 = arith.constant 0 : i32
    return %c0_i32, %c0_i32_0 : i32, i32
  }
  func.func @transform_4(%arg0: i32, %arg1: i32) -> (i32, i32) {
    %c0_i32 = arith.constant 0 : i32
    %c0_i32_0 = arith.constant 0 : i32
    %c0_i32_1 = arith.constant 0 : i32
    return %c0_i32, %c0_i32_0 : i32, i32
  }
  func.func @transform_5(%arg0: i32, %arg1: i32) -> (i32, i32) {
    %c0_i32 = arith.constant 0 : i32
    %c0_i32_0 = arith.constant 0 : i32
    %c0_i32_1 = arith.constant 0 : i32
    return %c0_i32, %c0_i32_0 : i32, i32
  }
  func.func @transform_6(%arg0: i32, %arg1: i32) -> (i32, i32) {
    %c0_i32 = arith.constant 0 : i32
    %c0_i32_0 = arith.constant 0 : i32
    %c0_i32_1 = arith.constant 0 : i32
    return %c0_i32, %c0_i32_0 : i32, i32
  }
  func.func @transform_7(%arg0: i32, %arg1: i32) -> (i32, i32) {
    %c0_i32 = arith.constant 0 : i32
    %c0_i32_0 = arith.constant 0 : i32
    %c0_i32_1 = arith.constant 0 : i32
    return %c0_i32, %c0_i32_0 : i32, i32
  }
  func.func @transform_8(%arg0: i32, %arg1: i32) -> (i32, i32) {
    %c0_i32 = arith.constant 0 : i32
    %c0_i32_0 = arith.constant 0 : i32
    %c0_i32_1 = arith.constant 0 : i32
    return %c0_i32, %c0_i32_0 : i32, i32
  }
  func.func @transform_9(%arg0: i32, %arg1: i32) -> (i32, i32) {
    %c0_i32 = arith.constant 0 : i32
    %c0_i32_0 = arith.constant 0 : i32
    %c0_i32_1 = arith.constant 0 : i32
    return %c0_i32, %c0_i32_0 : i32, i32
  }
  func.func @transform_10(%arg0: i32, %arg1: i32) -> (i32, i32, i32) {
    %c0_i32 = arith.constant 0 : i32
    %c0_i32_0 = arith.constant 0 : i32
    return %arg1, %arg0, %c0_i32 : i32, i32, i32
  }
  func.func @transform_11(%arg0: i32, %arg1: i32) -> (i32, i32, i32) {
    %c0_i32 = arith.constant 0 : i32
    %c0_i32_0 = arith.constant 0 : i32
    return %arg1, %arg0, %c0_i32 : i32, i32, i32
  }
}

</mosaic_0001>

<llo_original>
// kernel: tpu_custom_call.1
$region0: #{tpu_custom_call.1}
  #allocation0 [shape = 'u32[]', space=smem, size = 0x4, offset = 0x4, fixed_abs, tag = 'smem constant byte address 0x4 - core index']
  #allocation1 [shape = 'u32[144,128]{1,0:T(1,128)}', space=vmem, size = 0x12000, scoped, tag = 'internal scratch']
  #allocation2 [shape = 'f32[8,128]{1,0:T(8,128)}', space=vmem, size = 0x1000, scoped, tag = 'scratch operand']
  #allocation3 [shape = 'f32[8,8,384]{2,1,0:T(8,128)}', space=vmem, size = 0x18000, scoped, tag = 'scratch operand']
  %s0 = inlined_call_operand.hbm [shape: f32[8,8,32], index: 0, kind: input, shape index: {}]
  %s1 = inlined_call_operand.hbm [shape: f32[8,128], index: 1, kind: input, shape index: {}]
  %s2 = inlined_call_operand.hbm [shape: f32[32,128], index: 2, kind: input, shape index: {}]
  %s3 = inlined_call_operand.vmem [shape: f32[1,128], index: 3, kind: input, shape index: {}]
  %s4 = inlined_call_operand.hbm [shape: f32[128,384], index: 4, kind: input, shape index: {}]
  %s5 = inlined_call_operand.vmem [shape: f32[1,384], index: 5, kind: input, shape index: {}]
  %s6 = inlined_call_operand.hbm [shape: f32[128,384], index: 6, kind: input, shape index: {}]
  %s7 = inlined_call_operand.vmem [shape: f32[1,128], index: 7, kind: input, shape index: {}]
  %s8 = inlined_call_operand.hbm [shape: f32[128,128], index: 8, kind: input, shape index: {}]
  %s9 = inlined_call_operand.vmem [shape: f32[1,128], index: 9, kind: input, shape index: {}]
  %s10 = inlined_call_operand.hbm [shape: f32[8,8,128], index: 10, kind: output, shape index: {0}]
  %s11 = inlined_call_operand.hbm [shape: f32[8,8,128], index: 11, kind: output, shape index: {1}]
  %12 = xla_tuple %s10, %s11
  %s13 = sld [smem:[#allocation0]]
  $region86: #{tpu_custom_call.1} parent=0
    _
  %s15 = ssub.s32 1, %s13
  %s16 = scalar_select 0, %s15, %s13
  $region1: #{tpu_custom_call.1} parent=0
    #allocation4 [shape = 'u8[32768]{0}', space=vmem, size = 0x8000, scoped, tag = 'input window, operand 0, single buffered']
    #allocation5 [shape = 's32[1]{0}', space=sflag, size = 0x4, scoped, tag = 'scoped memory for tpu_custom_call.1']
    #allocation6 [shape = 's32[1]{0}', space=sflag, size = 0x4, scoped, tag = 'scoped memory for tpu_custom_call.1']
    #allocation7 [shape = 'u8[4096]{0}', space=vmem, size = 0x1000, scoped, tag = 'input window, operand 1, single buffered']
    #allocation8 [shape = 's32[1]{0}', space=sflag, size = 0x4, scoped, tag = 'scoped memory for tpu_custom_call.1']
    #allocation9 [shape = 'u8[16384]{0}', space=vmem, size = 0x4000, scoped, tag = 'input window, operand 2, single buffered']
    #allocation10 [shape = 'u8[196608]{0}', space=vmem, size = 0x30000, scoped, tag = 'input window, operand 4, single buffered']
    #allocation11 [shape = 's32[1]{0}', space=sflag, size = 0x4, scoped, tag = 'scoped memory for tpu_custom_call.1']
    #allocation12 [shape = 'u8[196608]{0}', space=vmem, size = 0x30000, scoped, tag = 'input window, operand 6, single buffered']
    #allocation13 [shape = 'u8[65536]{0}', space=vmem, size = 0x10000, scoped, tag = 'input window, operand 8, single buffered']
    #allocation14 [shape = 's32[1]{0}', space=sflag, size = 0x4, scoped, tag = 'scoped memory for tpu_custom_call.1']
    #allocation15 [shape = 'u8[32768]{0}', space=vmem, size = 0x8000, scoped, tag = 'output window, operand 0, single buffered']
    #allocation16 [shape = 'u8[32768]{0}', space=vmem, size = 0x8000, scoped, tag = 'output window, operand 1, single buffered']
    #allocation17 [shape = 's32[1]{0}', space=sflag, size = 0x4, scoped, tag = 'scoped memory for tpu_custom_call.1']
    %17 = vsyncpa [#allocation5], 0
    %18 = vsyncpa [#allocation8], 0
    %19 = vsyncpa [#allocation11], 0
    %20 = vsyncpa [#allocation14], 0
    %21 = vsyncpa [#allocation6], 0
    %22 = vsyncpa [#allocation17], 0
    // Predicated region
    $region2: #{tpu_custom_call.1} parent=1 // pred_check
      _
    $region3: #{tpu_custom_call.1} parent=1 // pred_check_branch
      %24 = sbr.rel (0) target = $region5
    $region4: #{tpu_custom_call.1} parent=1 // pred_region
      %s26 = ssub.s32 1024, 1024
      %27 = vsyncadd [#allocation5], %s26
      %s28 = sshll.u32 [#allocation4], 4
      %s29 = int_to_ptr.vmem [resolvable:$true] %s28
      %34 = dma.hbm_to_vmem [thread:$0]  %s0, 1024, %s29, [#allocation5], 128, 128, 8
    $region5: #{tpu_custom_call.1} parent=1 // pred_fallthru
      _
    // Predicated region
    $region6: #{tpu_custom_call.1} parent=1 // pred_check
      _
    $region7: #{tpu_custom_call.1} parent=1 // pred_check_branch
      %36 = sbr.rel (0) target = $region9
    $region8: #{tpu_custom_call.1} parent=1 // pred_region
      %s38 = ssub.s32 128, 128
      %39 = vsyncadd [#allocation8], %s38
      %s41 = sshll.u32 [#allocation7], 4
      %s42 = int_to_ptr.vmem [resolvable:$true] %s41
      %44 = dma.hbm_to_vmem [thread:$0]  %s1, 128, %s42, [#allocation8]
    $region9: #{tpu_custom_call.1} parent=1 // pred_fallthru
      _
    // Predicated region
    $region10: #{tpu_custom_call.1} parent=1 // pred_check
      _
    $region11: #{tpu_custom_call.1} parent=1 // pred_check_branch
      %46 = sbr.rel (0) target = $region13
    $region12: #{tpu_custom_call.1} parent=1 // pred_region
      %s48 = ssub.s32 512, 512
      %49 = vsyncadd [#allocation8], %s48
      %s50 = sshll.u32 [#allocation9], 4
      %s51 = int_to_ptr.vmem [resolvable:$true] %s50
      %56 = dma.hbm_to_vmem [thread:$0]  %s2, 512, %s51, [#allocation8], 128, 128, 8
    $region13: #{tpu_custom_call.1} parent=1 // pred_fallthru
      _
    // Predicated region
    $region14: #{tpu_custom_call.1} parent=1 // pred_check
      _
    $region15: #{tpu_custom_call.1} parent=1 // pred_check_branch
      %58 = sbr.rel (0) target = $region17
    $region16: #{tpu_custom_call.1} parent=1 // pred_region
      _
    $region17: #{tpu_custom_call.1} parent=1 // pred_fallthru
      _
    // Predicated region
    $region18: #{tpu_custom_call.1} parent=1 // pred_check
      _
    $region19: #{tpu_custom_call.1} parent=1 // pred_check_branch
      %60 = sbr.rel (0) target = $region21
    $region20: #{tpu_custom_call.1} parent=1 // pred_region
      %s62 = ssub.s32 6144, 6144
      %63 = vsyncadd [#allocation11], %s62
      %s64 = sshll.u32 [#allocation10], 4
      %s65 = int_to_ptr.vmem [resolvable:$true] %s64
      %70 = dma.hbm_to_vmem [thread:$0]  %s4, 6144, %s65, [#allocation11], 384, 384, 24
    $region21: #{tpu_custom_call.1} parent=1 // pred_fallthru
      _
    // Predicated region
    $region22: #{tpu_custom_call.1} parent=1 // pred_check
      _
    $region23: #{tpu_custom_call.1} parent=1 // pred_check_branch
      %72 = sbr.rel (0) target = $region25
    $region24: #{tpu_custom_call.1} parent=1 // pred_region
      _
    $region25: #{tpu_custom_call.1} parent=1 // pred_fallthru
      _
    // Predicated region
    $region26: #{tpu_custom_call.1} parent=1 // pred_check
      _
    $region27: #{tpu_custom_call.1} parent=1 // pred_check_branch
      %74 = sbr.rel (0) target = $region29
    $region28: #{tpu_custom_call.1} parent=1 // pred_region
      %s76 = ssub.s32 6144, 6144
      %77 = vsyncadd [#allocation11], %s76
      %s78 = sshll.u32 [#allocation12], 4
      %s79 = int_to_ptr.vmem [resolvable:$true] %s78
      %84 = dma.hbm_to_vmem [thread:$0]  %s6, 6144, %s79, [#allocation11], 384, 384, 24
    $region29: #{tpu_custom_call.1} parent=1 // pred_fallthru
      _
    // Predicated region
    $region30: #{tpu_custom_call.1} parent=1 // pred_check
      _
    $region31: #{tpu_custom_call.1} parent=1 // pred_check_branch
      %86 = sbr.rel (0) target = $region33
    $region32: #{tpu_custom_call.1} parent=1 // pred_region
      _
    $region33: #{tpu_custom_call.1} parent=1 // pred_fallthru
      _
    // Predicated region
    $region34: #{tpu_custom_call.1} parent=1 // pred_check
      _
    $region35: #{tpu_custom_call.1} parent=1 // pred_check_branch
      %88 = sbr.rel (0) target = $region37
    $region36: #{tpu_custom_call.1} parent=1 // pred_region
      %s90 = ssub.s32 2048, 2048
      %91 = vsyncadd [#allocation14], %s90
      %s92 = sshll.u32 [#allocation13], 4
      %s93 = int_to_ptr.vmem [resolvable:$true] %s92
      %98 = dma.hbm_to_vmem [thread:$0]  %s8, 2048, %s93, [#allocation14], 128, 128, 8
    $region37: #{tpu_custom_call.1} parent=1 // pred_fallthru
      _
    // Predicated region
    $region38: #{tpu_custom_call.1} parent=1 // pred_check
      _
    $region39: #{tpu_custom_call.1} parent=1 // pred_check_branch
      %100 = sbr.rel (0) target = $region41
    $region40: #{tpu_custom_call.1} parent=1 // pred_region
      _
    $region41: #{tpu_custom_call.1} parent=1 // pred_fallthru
      _
    // Predicated region
    $region42: #{tpu_custom_call.1} parent=1 // pred_check
      _
    $region43: #{tpu_custom_call.1} parent=1 // pred_check_branch
      %102 = sbr.rel (0) target = $region45
    $region44: #{tpu_custom_call.1} parent=1 // pred_region
      %103 = dma.done [#allocation5], 1024
    $region45: #{tpu_custom_call.1} parent=1 // pred_fallthru
      _
    // Predicated region
    $region46: #{tpu_custom_call.1} parent=1 // pred_check
      _
    $region47: #{tpu_custom_call.1} parent=1 // pred_check_branch
      %105 = sbr.rel (0) target = $region49
    $region48: #{tpu_custom_call.1} parent=1 // pred_region
      %106 = dma.done [#allocation8], 128
    $region49: #{tpu_custom_call.1} parent=1 // pred_fallthru
      _
    // Predicated region
    $region50: #{tpu_custom_call.1} parent=1 // pred_check
      _
    $region51: #{tpu_custom_call.1} parent=1 // pred_check_branch
      %108 = sbr.rel (0) target = $region53
    $region52: #{tpu_custom_call.1} parent=1 // pred_region
      %109 = dma.done [#allocation8], 512
    $region53: #{tpu_custom_call.1} parent=1 // pred_fallthru
      _
    // Predicated region
    $region54: #{tpu_custom_call.1} parent=1 // pred_check
      _
    $region55: #{tpu_custom_call.1} parent=1 // pred_check_branch
      %111 = sbr.rel (0) target = $region57
    $region56: #{tpu_custom_call.1} parent=1 // pred_region
      %112 = dma.done [#allocation11], 6144
    $region57: #{tpu_custom_call.1} parent=1 // pred_fallthru
      _
    // Predicated region
    $region58: #{tpu_custom_call.1} parent=1 // pred_check
      _
    $region59: #{tpu_custom_call.1} parent=1 // pred_check_branch
      %114 = sbr.rel (0) target = $region61
    $region60: #{tpu_custom_call.1} parent=1 // pred_region
      %115 = dma.done [#allocation11], 6144
    $region61: #{tpu_custom_call.1} parent=1 // pred_fallthru
      _
    // Predicated region
    $region62: #{tpu_custom_call.1} parent=1 // pred_check
      _
    $region63: #{tpu_custom_call.1} parent=1 // pred_check_branch
      %117 = sbr.rel (0) target = $region65
    $region64: #{tpu_custom_call.1} parent=1 // pred_region
      %118 = dma.done [#allocation14], 2048
    $region65: #{tpu_custom_call.1} parent=1 // pred_fallthru
      _
    %p119 = scmp.eq.s32.totalorder 0, 0
    // Predicated region
    $region66: #{tpu_custom_call.1} parent=1 // pred_check
      %p120 = pneg %p119
    $region67: #{tpu_custom_call.1} parent=1 // pred_check_branch
      %122 = sbr.rel (%p120) target = $region69
    $region68: #{tpu_custom_call.1} parent=1 // pred_region
      %v123 = vld [vmem:[#allocation7] sm:$0xff]
      %124 = vst [vmem:[#allocation2] sm:$0xff] %v123
    $region69: #{tpu_custom_call.1} parent=1 // pred_fallthru
      _
    %v125 = vld [vmem:[#allocation4] sm:$0xff]
    %v126 = vld [vmem:[#allocation4 + $0x8] sm:$0xff]
    %v127 = vld [vmem:[#allocation4 + $0x10] sm:$0xff]
    %v128 = vld [vmem:[#allocation4 + $0x18] sm:$0xff]
    %v129 = vld [vmem:[#allocation4 + $0x20] sm:$0xff]
    %v130 = vld [vmem:[#allocation4 + $0x28] sm:$0xff]
    %v131 = vld [vmem:[#allocation4 + $0x30] sm:$0xff]
    %v132 = vld [vmem:[#allocation4 + $0x38] sm:$0xff]
    %v133 = vld [vmem:[#allocation9] sm:$0xff]
    %v134 = vld [vmem:[#allocation9 + $0x8] sm:$0xff]
    %v135 = vld [vmem:[#allocation9 + $0x10] sm:$0xff]
    %v136 = vld [vmem:[#allocation9 + $0x18] sm:$0xff]
    %v137 = vld [vmem:[%s3] sm:$0x1]
    %v139 = vlaneseq
    %v140 = vshrl.u32 %v139, 7
    %v141 = vsub.s32 0, %v140
    %v142 = vrot.slane %v137, %v141
    %vm144 = vcmask 261120
    %v146 = vsel %vm144, %v125, 0
    %v149 = vsel %vm144, %v126, 0
    %v152 = vsel %vm144, %v127, 0
    %v155 = vsel %vm144, %v128, 0
    %v158 = vsel %vm144, %v129, 0
    %v161 = vsel %vm144, %v130, 0
    %v164 = vsel %vm144, %v131, 0
    %v167 = vsel %vm144, %v132, 0
    %169 = vmatprep.subr.mxu0 0.0
    %170 = vmatpush1.msra.mxu0 %v133
    %171 = vmatprep.subr.mxu0 0.0
    %172 = vmatpush1.msra.mxu0 %v134
    %173 = vmatprep.subr.mxu0 0.0
    %174 = vmatpush1.msra.mxu0 %v135
    %175 = vmatprep.subr.mxu0 0.0
    %176 = vmatpush1.msra.mxu0 %v136
    %177 = vmatprep.subr.mxu0 0.0
    %178 = vmatpush1.msra.mxu0 0.0
    %179 = vmatprep.subr.mxu0 0.0
    %180 = vmatpush1.msra.mxu0 0.0
    %181 = vmatprep.subr.mxu0 0.0
    %182 = vmatpush1.msra.mxu0 0.0
    %183 = vmatprep.subr.mxu0 0.0
    %184 = vmatpush1.msra.mxu0 0.0
    %185 = vmatprep.subr.mxu0 0.0
    %186 = vmatpush1.msra.mxu0 0.0
    %187 = vmatprep.subr.mxu0 0.0
    %188 = vmatpush1.msra.mxu0 0.0
    %189 = vmatprep.subr.mxu0 0.0
    %190 = vmatpush1.msra.mxu0 0.0
    %191 = vmatprep.subr.mxu0 0.0
    %192 = vmatpush1.msra.mxu0 0.0
    %193 = vmatprep.subr.mxu0 0.0
    %194 = vmatpush1.msra.mxu0 0.0
    %195 = vmatprep.subr.mxu0 0.0
    %196 = vmatpush1.msra.mxu0 0.0
    %197 = vmatprep.subr.mxu0 0.0
    %198 = vmatpush1.msra.mxu0 0.0
    %199 = vmatprep.subr.mxu0 0.0
    %200 = vmatpush1.msra.mxu0 0.0
    %201 = vmatprep.subr.mxu0 0.0
    %202 = vmatpush1.msra.mxu0 0.0
    %203 = vmatprep.subr.mxu0 0.0
    %204 = vmatpush1.msra.mxu0 0.0
    %205 = vmatprep.subr.mxu0 0.0
    %206 = vmatpush1.msra.mxu0 0.0
    %207 = vmatprep.subr.mxu0 0.0
    %208 = vmatpush1.msra.mxu0 0.0
    %209 = vmatprep.subr.mxu0 0.0
    %210 = vmatpush1.msra.mxu0 0.0
    %211 = vmatprep.subr.mxu0 0.0
    %212 = vmatpush1.msra.mxu0 0.0
    %213 = vmatprep.subr.mxu0 0.0
    %214 = vmatpush1.msra.mxu0 0.0
    %215 = vmatprep.subr.mxu0 0.0
    %216 = vmatpush1.msra.mxu0 0.0
    %217 = vmatprep.subr.mxu0 0.0
    %218 = vmatpush1.msra.mxu0 0.0
    %219 = vmatprep.subr.mxu0 0.0
    %220 = vmatpush1.msra.mxu0 0.0
    %221 = vmatprep.subr.mxu0 0.0
    %222 = vmatpush1.msra.mxu0 0.0
    %223 = vmatprep.subr.mxu0 0.0
    %224 = vmatpush1.msra.mxu0 0.0
    %225 = vmatprep.subr.mxu0 0.0
    %226 = vmatpush1.msra.mxu0 0.0
    %227 = vmatprep.subr.mxu0 0.0
    %228 = vmatpush1.msra.mxu0 0.0
    %229 = vmatprep.subr.mxu0 0.0
    %230 = vmatpush1.msra.mxu0 0.0
    %231 = vmatprep.subr.mxu0 0.0
    %232 = vmatpush1.msra.mxu0 0.0
    %233 = vmatprep.mubr.f32.mxu0 0.0
    %234 = vmatmul.mubr.f32.gmra.mrb[0].mxu0 %v146
    %v235 = vpop.f32.mrb[0].mxu0
    %v236 = vadd.f32 %v142, %v235
    %v237 = vpop.f32.mrb[0].mxu0
    %238 = vmatprep.mubr.f32.mxu0 0.0
    %239 = vmatmul.mubr.f32.gmra.mrb[0].mxu0 %v149
    %v240 = vpop.f32.mrb[0].mxu0
    %v241 = vadd.f32 %v142, %v240
    %v242 = vpop.f32.mrb[0].mxu0
    %243 = vmatprep.mubr.f32.mxu0 0.0
    %244 = vmatmul.mubr.f32.gmra.mrb[0].mxu0 %v152
    %v245 = vpop.f32.mrb[0].mxu0
    %v246 = vadd.f32 %v142, %v245
    %v247 = vpop.f32.mrb[0].mxu0
    %248 = vmatprep.mubr.f32.mxu0 0.0
    %249 = vmatmul.mubr.f32.gmra.mrb[0].mxu0 %v155
    %v250 = vpop.f32.mrb[0].mxu0
    %v251 = vadd.f32 %v142, %v250
    %v252 = vpop.f32.mrb[0].mxu0
    %253 = vmatprep.mubr.f32.mxu0 0.0
    %254 = vmatmul.mubr.f32.gmra.mrb[0].mxu0 %v158
    %v255 = vpop.f32.mrb[0].mxu0
    %v256 = vadd.f32 %v142, %v255
    %v257 = vpop.f32.mrb[0].mxu0
    %258 = vmatprep.mubr.f32.mxu0 0.0
    %259 = vmatmul.mubr.f32.gmra.mrb[0].mxu0 %v161
    %v260 = vpop.f32.mrb[0].mxu0
    %v261 = vadd.f32 %v142, %v260
    %v262 = vpop.f32.mrb[0].mxu0
    %263 = vmatprep.mubr.f32.mxu0 0.0
    %264 = vmatmul.mubr.f32.gmra.mrb[0].mxu0 %v164
    %v265 = vpop.f32.mrb[0].mxu0
    %v266 = vadd.f32 %v142, %v265
    %v267 = vpop.f32.mrb[0].mxu0
    %268 = vmatprep.mubr.f32.mxu0 0.0
    %269 = vmatmul.mubr.f32.gmra.mrb[0].mxu0 %v167
    %v270 = vpop.f32.mrb[0].mxu0
    %v271 = vadd.f32 %v142, %v270
    %v272 = vpop.f32.mrb[0].mxu0
    %273 = vdwg.mxu0
    %v274 = vmax.f32 %v236, 0.0
    %v275 = vmax.f32 %v241, 0.0
    %v276 = vmax.f32 %v246, 0.0
    %v277 = vmax.f32 %v251, 0.0
    %v278 = vmax.f32 %v256, 0.0
    %v279 = vmax.f32 %v261, 0.0
    %v280 = vmax.f32 %v266, 0.0
    %v281 = vmax.f32 %v271, 0.0
    %v282 = vld [vmem:[#allocation10] sm:$0xff]
    %v283 = vld [vmem:[#allocation10 + $0x8] sm:$0xff]
    %v284 = vld [vmem:[#allocation10 + $0x10] sm:$0xff]
    %v285 = vld [vmem:[#allocation10 + $0x18] sm:$0xff]
    %v286 = vld [vmem:[#allocation10 + $0x20] sm:$0xff]
    %v287 = vld [vmem:[#allocation10 + $0x28] sm:$0xff]
    %v288 = vld [vmem:[#allocation10 + $0x30] sm:$0xff]
    %v289 = vld [vmem:[#allocation10 + $0x38] sm:$0xff]
    %v290 = vld [vmem:[#allocation10 + $0x40] sm:$0xff]
    %v291 = vld [vmem:[#allocation10 + $0x48] sm:$0xff]
    %v292 = vld [vmem:[#allocation10 + $0x50] sm:$0xff]
    %v293 = vld [vmem:[#allocation10 + $0x58] sm:$0xff]
    %v294 = vld [vmem:[#allocation10 + $0x60] sm:$0xff]
    %v295 = vld [vmem:[#allocation10 + $0x68] sm:$0xff]
    %v296 = vld [vmem:[#allocation10 + $0x70] sm:$0xff]
    %v297 = vld [vmem:[#allocation10 + $0x78] sm:$0xff]
    %v298 = vld [vmem:[#allocation10 + $0x80] sm:$0xff]
    %v299 = vld [vmem:[#allocation10 + $0x88] sm:$0xff]
    %v300 = vld [vmem:[#allocation10 + $0x90] sm:$0xff]
    %v301 = vld [vmem:[#allocation10 + $0x98] sm:$0xff]
    %v302 = vld [vmem:[#allocation10 + $0xa0] sm:$0xff]
    %v303 = vld [vmem:[#allocation10 + $0xa8] sm:$0xff]
    %v304 = vld [vmem:[#allocation10 + $0xb0] sm:$0xff]
    %v305 = vld [vmem:[#allocation10 + $0xb8] sm:$0xff]
    %v306 = vld [vmem:[#allocation10 + $0xc0] sm:$0xff]
    %v307 = vld [vmem:[#allocation10 + $0xc8] sm:$0xff]
    %v308 = vld [vmem:[#allocation10 + $0xd0] sm:$0xff]
    %v309 = vld [vmem:[#allocation10 + $0xd8] sm:$0xff]
    %v310 = vld [vmem:[#allocation10 + $0xe0] sm:$0xff]
    %v311 = vld [vmem:[#allocation10 + $0xe8] sm:$0xff]
    %v312 = vld [vmem:[#allocation10 + $0xf0] sm:$0xff]
    %v313 = vld [vmem:[#allocation10 + $0xf8] sm:$0xff]
    %v314 = vld [vmem:[#allocation10 + $0x100] sm:$0xff]
    %v315 = vld [vmem:[#allocation10 + $0x108] sm:$0xff]
    %v316 = vld [vmem:[#allocation10 + $0x110] sm:$0xff]
    %v317 = vld [vmem:[#allocation10 + $0x118] sm:$0xff]
    %v318 = vld [vmem:[#allocation10 + $0x120] sm:$0xff]
    %v319 = vld [vmem:[#allocation10 + $0x128] sm:$0xff]
    %v320 = vld [vmem:[#allocation10 + $0x130] sm:$0xff]
    %v321 = vld [vmem:[#allocation10 + $0x138] sm:$0xff]
    %v322 = vld [vmem:[#allocation10 + $0x140] sm:$0xff]
    %v323 = vld [vmem:[#allocation10 + $0x148] sm:$0xff]
    %v324 = vld [vmem:[#allocation10 + $0x150] sm:$0xff]
    %v325 = vld [vmem:[#allocation10 + $0x158] sm:$0xff]
    %v326 = vld [vmem:[#allocation10 + $0x160] sm:$0xff]
    %v327 = vld [vmem:[#allocation10 + $0x168] sm:$0xff]
    %v328 = vld [vmem:[#allocation10 + $0x170] sm:$0xff]
    %v329 = vld [vmem:[#allocation10 + $0x178] sm:$0xff]
    %v330 = vld [vmem:[%s5] sm:$0x7]
    %v332 = vlaneseq
    %v333 = vshrl.u32 %v332, 7
    %v334 = vsub.s32 0, %v333
    %v335 = vrot.slane %v330, %v334
    %v336 = vlaneseq
    %v337 = vshrl.u32 %v336, 7
    %v338 = vsub.s32 1, %v337
    %v339 = vrot.slane %v330, %v338
    %v340 = vlaneseq
    %v341 = vshrl.u32 %v340, 7
    %v342 = vsub.s32 2, %v341
    %v343 = vrot.slane %v330, %v342
    %347 = vmatprep.subr.mxu0 %v283
    %348 = vmatpush1.msra.mxu0 %v282
    %349 = vmatprep.subr.mxu0 %v286
    %350 = vmatpush1.msra.mxu0 %v285
    %351 = vmatprep.subr.mxu0 %v289
    %352 = vmatpush1.msra.mxu0 %v288
    %353 = vmatprep.subr.mxu0 %v292
    %354 = vmatpush1.msra.mxu0 %v291
    %355 = vmatprep.subr.mxu0 %v295
    %356 = vmatpush1.msra.mxu0 %v294
    %357 = vmatprep.subr.mxu0 %v298
    %358 = vmatpush1.msra.mxu0 %v297
    %359 = vmatprep.subr.mxu0 %v301
    %360 = vmatpush1.msra.mxu0 %v300
    %361 = vmatprep.subr.mxu0 %v304
    %362 = vmatpush1.msra.mxu0 %v303
    %363 = vmatprep.subr.mxu0 %v307
    %364 = vmatpush1.msra.mxu0 %v306
    %365 = vmatprep.subr.mxu0 %v310
    %366 = vmatpush1.msra.mxu0 %v309
    %367 = vmatprep.subr.mxu0 %v313
    %368 = vmatpush1.msra.mxu0 %v312
    %369 = vmatprep.subr.mxu0 %v316
    %370 = vmatpush1.msra.mxu0 %v315
    %371 = vmatprep.subr.mxu0 %v319
    %372 = vmatpush1.msra.mxu0 %v318
    %373 = vmatprep.subr.mxu0 %v322
    %374 = vmatpush1.msra.mxu0 %v321
    %375 = vmatprep.subr.mxu0 %v325
    %376 = vmatpush1.msra.mxu0 %v324
    %377 = vmatprep.subr.mxu0 %v328
    %378 = vmatpush1.msra.mxu0 %v327
    %379 = vmatprep.subr.mxu0 0.0
    %380 = vmatpush1.msra.mxu0 0.0
    %381 = vmatprep.subr.mxu0 0.0
    %382 = vmatpush1.msra.mxu0 0.0
    %383 = vmatprep.subr.mxu0 0.0
    %384 = vmatpush1.msra.mxu0 0.0
    %385 = vmatprep.subr.mxu0 0.0
    %386 = vmatpush1.msra.mxu0 0.0
    %387 = vmatprep.subr.mxu0 0.0
    %388 = vmatpush1.msra.mxu0 0.0
    %389 = vmatprep.subr.mxu0 0.0
    %390 = vmatpush1.msra.mxu0 0.0
    %391 = vmatprep.subr.mxu0 0.0
    %392 = vmatpush1.msra.mxu0 0.0
    %393 = vmatprep.subr.mxu0 0.0
    %394 = vmatpush1.msra.mxu0 0.0
    %395 = vmatprep.subr.mxu0 0.0
    %396 = vmatpush1.msra.mxu0 0.0
    %397 = vmatprep.subr.mxu0 0.0
    %398 = vmatpush1.msra.mxu0 0.0
    %399 = vmatprep.subr.mxu0 0.0
    %400 = vmatpush1.msra.mxu0 0.0
    %401 = vmatprep.subr.mxu0 0.0
    %402 = vmatpush1.msra.mxu0 0.0
    %403 = vmatprep.subr.mxu0 0.0
    %404 = vmatpush1.msra.mxu0 0.0
    %405 = vmatprep.subr.mxu0 0.0
    %406 = vmatpush1.msra.mxu0 0.0
    %407 = vmatprep.subr.mxu0 0.0
    %408 = vmatpush1.msra.mxu0 0.0
    %409 = vmatprep.subr.mxu0 0.0
    %410 = vmatpush1.msra.mxu0 0.0
    %411 = vmatprep.mubr.f32.mxu0 0.0
    %412 = vmatmul.mubr.f32.gmra.mrb[0].mxu0 %v274
    %v413 = vpop.f32.mrb[0].mxu0
    %v414 = vadd.f32 %v335, %v413
    %v415 = vpop.f32.mrb[0].mxu0
    %v416 = vadd.f32 %v339, %v415
    %417 = vmatprep.mubr.f32.mxu0 0.0
    %418 = vmatmul.mubr.f32.gmra.mrb[0].mxu0 %v275
    %v419 = vpop.f32.mrb[0].mxu0
    %v420 = vadd.f32 %v335, %v419
    %v421 = vpop.f32.mrb[0].mxu0
    %v422 = vadd.f32 %v339, %v421
    %423 = vmatprep.mubr.f32.mxu0 0.0
    %424 = vmatmul.mubr.f32.gmra.mrb[0].mxu0 %v276
    %v425 = vpop.f32.mrb[0].mxu0
    %v426 = vadd.f32 %v335, %v425
    %v427 = vpop.f32.mrb[0].mxu0
    %v428 = vadd.f32 %v339, %v427
    %429 = vmatprep.mubr.f32.mxu0 0.0
    %430 = vmatmul.mubr.f32.gmra.mrb[0].mxu0 %v277
    %v431 = vpop.f32.mrb[0].mxu0
    %v432 = vadd.f32 %v335, %v431
    %v433 = vpop.f32.mrb[0].mxu0
    %v434 = vadd.f32 %v339, %v433
    %435 = vmatprep.mubr.f32.mxu0 0.0
    %436 = vmatmul.mubr.f32.gmra.mrb[0].mxu0 %v278
    %v437 = vpop.f32.mrb[0].mxu0
    %v438 = vadd.f32 %v335, %v437
    %v439 = vpop.f32.mrb[0].mxu0
    %v440 = vadd.f32 %v339, %v439
    %441 = vmatprep.mubr.f32.mxu0 0.0
    %442 = vmatmul.mubr.f32.gmra.mrb[0].mxu0 %v279
    %v443 = vpop.f32.mrb[0].mxu0
    %v444 = vadd.f32 %v335, %v443
    %v445 = vpop.f32.mrb[0].mxu0
    %v446 = vadd.f32 %v339, %v445
    %447 = vmatprep.mubr.f32.mxu0 0.0
    %448 = vmatmul.mubr.f32.gmra.mrb[0].mxu0 %v280
    %v449 = vpop.f32.mrb[0].mxu0
    %v450 = vadd.f32 %v335, %v449
    %v451 = vpop.f32.mrb[0].mxu0
    %v452 = vadd.f32 %v339, %v451
    %453 = vmatprep.mubr.f32.mxu0 0.0
    %454 = vmatmul.mubr.f32.gmra.mrb[0].mxu0 %v281
    %v455 = vpop.f32.mrb[0].mxu0
    %v456 = vadd.f32 %v335, %v455
    %v457 = vpop.f32.mrb[0].mxu0
    %v458 = vadd.f32 %v339, %v457
    %459 = vdwg.mxu0
    %460 = vmatprep.subr.mxu0 0.0
    %461 = vmatpush1.msra.mxu0 %v284
    %462 = vmatprep.subr.mxu0 0.0
    %463 = vmatpush1.msra.mxu0 %v287
    %464 = vmatprep.subr.mxu0 0.0
    %465 = vmatpush1.msra.mxu0 %v290
    %466 = vmatprep.subr.mxu0 0.0
    %467 = vmatpush1.msra.mxu0 %v293
    %468 = vmatprep.subr.mxu0 0.0
    %469 = vmatpush1.msra.mxu0 %v296
    %470 = vmatprep.subr.mxu0 0.0
    %471 = vmatpush1.msra.mxu0 %v299
    %472 = vmatprep.subr.mxu0 0.0
    %473 = vmatpush1.msra.mxu0 %v302
    %474 = vmatprep.subr.mxu0 0.0
    %475 = vmatpush1.msra.mxu0 %v305
    %476 = vmatprep.subr.mxu0 0.0
    %477 = vmatpush1.msra.mxu0 %v308
    %478 = vmatprep.subr.mxu0 0.0
    %479 = vmatpush1.msra.mxu0 %v311
    %480 = vmatprep.subr.mxu0 0.0
    %481 = vmatpush1.msra.mxu0 %v314
    %482 = vmatprep.subr.mxu0 0.0
    %483 = vmatpush1.msra.mxu0 %v317
    %484 = vmatprep.subr.mxu0 0.0
    %485 = vmatpush1.msra.mxu0 %v320
    %486 = vmatprep.subr.mxu0 0.0
    %487 = vmatpush1.msra.mxu0 %v323
    %488 = vmatprep.subr.mxu0 0.0
    %489 = vmatpush1.msra.mxu0 %v326
    %490 = vmatprep.subr.mxu0 0.0
    %491 = vmatpush1.msra.mxu0 %v329
    %492 = vmatprep.subr.mxu0 0.0
    %493 = vmatpush1.msra.mxu0 0.0
    %494 = vmatprep.subr.mxu0 0.0
    %495 = vmatpush1.msra.mxu0 0.0
    %496 = vmatprep.subr.mxu0 0.0
    %497 = vmatpush1.msra.mxu0 0.0
    %498 = vmatprep.subr.mxu0 0.0
    %499 = vmatpush1.msra.mxu0 0.0
    %500 = vmatprep.subr.mxu0 0.0
    %501 = vmatpush1.msra.mxu0 0.0
    %502 = vmatprep.subr.mxu0 0.0
    %503 = vmatpush1.msra.mxu0 0.0
    %504 = vmatprep.subr.mxu0 0.0
    %505 = vmatpush1.msra.mxu0 0.0
    %506 = vmatprep.subr.mxu0 0.0
    %507 = vmatpush1.msra.mxu0 0.0
    %508 = vmatprep.subr.mxu0 0.0
    %509 = vmatpush1.msra.mxu0 0.0
    %510 = vmatprep.subr.mxu0 0.0
    %511 = vmatpush1.msra.mxu0 0.0
    %512 = vmatprep.subr.mxu0 0.0
    %513 = vmatpush1.msra.mxu0 0.0
    %514 = vmatprep.subr.mxu0 0.0
    %515 = vmatpush1.msra.mxu0 0.0
    %516 = vmatprep.subr.mxu0 0.0
    %517 = vmatpush1.msra.mxu0 0.0
    %518 = vmatprep.subr.mxu0 0.0
    %519 = vmatpush1.msra.mxu0 0.0
    %520 = vmatprep.subr.mxu0 0.0
    %521 = vmatpush1.msra.mxu0 0.0
    %522 = vmatprep.subr.mxu0 0.0
    %523 = vmatpush1.msra.mxu0 0.0
    %524 = vmatprep.mubr.f32.mxu0 0.0
    %525 = vmatmul.mubr.f32.gmra.mrb[0].mxu0 %v274
    %v526 = vpop.f32.mrb[0].mxu0
    %v527 = vadd.f32 %v343, %v526
    %v528 = vpop.f32.mrb[0].mxu0
    %529 = vmatprep.mubr.f32.mxu0 0.0
    %530 = vmatmul.mubr.f32.gmra.mrb[0].mxu0 %v275
    %v531 = vpop.f32.mrb[0].mxu0
    %v532 = vadd.f32 %v343, %v531
    %v533 = vpop.f32.mrb[0].mxu0
    %534 = vmatprep.mubr.f32.mxu0 0.0
    %535 = vmatmul.mubr.f32.gmra.mrb[0].mxu0 %v276
    %v536 = vpop.f32.mrb[0].mxu0
    %v537 = vadd.f32 %v343, %v536
    %v538 = vpop.f32.mrb[0].mxu0
    %539 = vmatprep.mubr.f32.mxu0 0.0
    %540 = vmatmul.mubr.f32.gmra.mrb[0].mxu0 %v277
    %v541 = vpop.f32.mrb[0].mxu0
    %v542 = vadd.f32 %v343, %v541
    %v543 = vpop.f32.mrb[0].mxu0
    %544 = vmatprep.mubr.f32.mxu0 0.0
    %545 = vmatmul.mubr.f32.gmra.mrb[0].mxu0 %v278
    %v546 = vpop.f32.mrb[0].mxu0
    %v547 = vadd.f32 %v343, %v546
    %v548 = vpop.f32.mrb[0].mxu0
    %549 = vmatprep.mubr.f32.mxu0 0.0
    %550 = vmatmul.mubr.f32.gmra.mrb[0].mxu0 %v279
    %v551 = vpop.f32.mrb[0].mxu0
    %v552 = vadd.f32 %v343, %v551
    %v553 = vpop.f32.mrb[0].mxu0
    %554 = vmatprep.mubr.f32.mxu0 0.0
    %555 = vmatmul.mubr.f32.gmra.mrb[0].mxu0 %v280
    %v556 = vpop.f32.mrb[0].mxu0
    %v557 = vadd.f32 %v343, %v556
    %v558 = vpop.f32.mrb[0].mxu0
    %559 = vmatprep.mubr.f32.mxu0 0.0
    %560 = vmatmul.mubr.f32.gmra.mrb[0].mxu0 %v281
    %v561 = vpop.f32.mrb[0].mxu0
    %v562 = vadd.f32 %v343, %v561
    %v563 = vpop.f32.mrb[0].mxu0
    %564 = vdwg.mxu0
    %565 = vst [vmem:[#allocation3] sm:$0xff] %v414
    %566 = vst [vmem:[#allocation3 + $0x8] sm:$0xff] %v416
    %567 = vst [vmem:[#allocation3 + $0x10] sm:$0xff] %v527
    %568 = vst [vmem:[#allocation3 + $0x18] sm:$0xff] %v420
    %569 = vst [vmem:[#allocation3 + $0x20] sm:$0xff] %v422
    %570 = vst [vmem:[#allocation3 + $0x28] sm:$0xff] %v532
    %571 = vst [vmem:[#allocation3 + $0x30] sm:$0xff] %v426
    %572 = vst [vmem:[#allocation3 + $0x38] sm:$0xff] %v428
    %573 = vst [vmem:[#allocation3 + $0x40] sm:$0xff] %v537
    %574 = vst [vmem:[#allocation3 + $0x48] sm:$0xff] %v432
    %575 = vst [vmem:[#allocation3 + $0x50] sm:$0xff] %v434
    %576 = vst [vmem:[#allocation3 + $0x58] sm:$0xff] %v542
    %577 = vst [vmem:[#allocation3 + $0x60] sm:$0xff] %v438
    %578 = vst [vmem:[#allocation3 + $0x68] sm:$0xff] %v440
    %579 = vst [vmem:[#allocation3 + $0x70] sm:$0xff] %v547
    %580 = vst [vmem:[#allocation3 + $0x78] sm:$0xff] %v444
    %581 = vst [vmem:[#allocation3 + $0x80] sm:$0xff] %v446
    %582 = vst [vmem:[#allocation3 + $0x88] sm:$0xff] %v552
    %583 = vst [vmem:[#allocation3 + $0x90] sm:$0xff] %v450
    %584 = vst [vmem:[#allocation3 + $0x98] sm:$0xff] %v452
    %585 = vst [vmem:[#allocation3 + $0xa0] sm:$0xff] %v557
    %586 = vst [vmem:[#allocation3 + $0xa8] sm:$0xff] %v456
    %587 = vst [vmem:[#allocation3 + $0xb0] sm:$0xff] %v458
    %588 = vst [vmem:[#allocation3 + $0xb8] sm:$0xff] %v562
    %v589 = vld [vmem:[%s7] sm:$0x1]
    %v591 = vlaneseq
    %v592 = vshrl.u32 %v591, 7
    %v593 = vsub.s32 0, %v592
    %v594 = vrot.slane %v589, %v593
    %v596 = vld [vmem:[#allocation12] sm:$0xff]
    %v597 = vld [vmem:[#allocation12 + $0x8] sm:$0xff]
    %v598 = vld [vmem:[#allocation12 + $0x10] sm:$0xff]
    %v599 = vld [vmem:[#allocation12 + $0x18] sm:$0xff]
    %v600 = vld [vmem:[#allocation12 + $0x20] sm:$0xff]
    %v601 = vld [vmem:[#allocation12 + $0x28] sm:$0xff]
    %v602 = vld [vmem:[#allocation12 + $0x30] sm:$0xff]
    %v603 = vld [vmem:[#allocation12 + $0x38] sm:$0xff]
    %v604 = vld [vmem:[#allocation12 + $0x40] sm:$0xff]
    %v605 = vld [vmem:[#allocation12 + $0x48] sm:$0xff]
    %v606 = vld [vmem:[#allocation12 + $0x50] sm:$0xff]
    %v607 = vld [vmem:[#allocation12 + $0x58] sm:$0xff]
    %v608 = vld [vmem:[#allocation12 + $0x60] sm:$0xff]
    %v609 = vld [vmem:[#allocation12 + $0x68] sm:$0xff]
    %v610 = vld [vmem:[#allocation12 + $0x70] sm:$0xff]
    %v611 = vld [vmem:[#allocation12 + $0x78] sm:$0xff]
    %v612 = vld [vmem:[#allocation12 + $0x80] sm:$0xff]
    %v613 = vld [vmem:[#allocation12 + $0x88] sm:$0xff]
    %v614 = vld [vmem:[#allocation12 + $0x90] sm:$0xff]
    %v615 = vld [vmem:[#allocation12 + $0x98] sm:$0xff]
    %v616 = vld [vmem:[#allocation12 + $0xa0] sm:$0xff]
    %v617 = vld [vmem:[#allocation12 + $0xa8] sm:$0xff]
    %v618 = vld [vmem:[#allocation12 + $0xb0] sm:$0xff]
    %v619 = vld [vmem:[#allocation12 + $0xb8] sm:$0xff]
    %v620 = vld [vmem:[#allocation12 + $0xc0] sm:$0xff]
    %v621 = vld [vmem:[#allocation12 + $0xc8] sm:$0xff]
    %v622 = vld [vmem:[#allocation12 + $0xd0] sm:$0xff]
    %v623 = vld [vmem:[#allocation12 + $0xd8] sm:$0xff]
    %v624 = vld [vmem:[#allocation12 + $0xe0] sm:$0xff]
    %v625 = vld [vmem:[#allocation12 + $0xe8] sm:$0xff]
    %v626 = vld [vmem:[#allocation12 + $0xf0] sm:$0xff]
    %v627 = vld [vmem:[#allocation12 + $0xf8] sm:$0xff]
    %v628 = vld [vmem:[#allocation12 + $0x100] sm:$0xff]
    %v629 = vld [vmem:[#allocation12 + $0x108] sm:$0xff]
    %v630 = vld [vmem:[#allocation12 + $0x110] sm:$0xff]
    %v631 = vld [vmem:[#allocation12 + $0x118] sm:$0xff]
    %v632 = vld [vmem:[#allocation12 + $0x120] sm:$0xff]
    %v633 = vld [vmem:[#allocation12 + $0x128] sm:$0xff]
    %v634 = vld [vmem:[#allocation12 + $0x130] sm:$0xff]
    %v635 = vld [vmem:[#allocation12 + $0x138] sm:$0xff]
    %v636 = vld [vmem:[#allocation12 + $0x140] sm:$0xff]
    %v637 = vld [vmem:[#allocation12 + $0x148] sm:$0xff]
    %v638 = vld [vmem:[#allocation12 + $0x150] sm:$0xff]
    %v639 = vld [vmem:[#allocation12 + $0x158] sm:$0xff]
    %v640 = vld [vmem:[#allocation12 + $0x160] sm:$0xff]
    %v641 = vld [vmem:[#allocation12 + $0x168] sm:$0xff]
    %v642 = vld [vmem:[#allocation12 + $0x170] sm:$0xff]
    %v643 = vld [vmem:[#allocation12 + $0x178] sm:$0xff]
    %v644 = vld [vmem:[#allocation2] sm:$0xff]
    %v645 = vld [vmem:[#allocation3] sm:$0xff]
    %v646 = vld [vmem:[#allocation3 + $0x8] sm:$0xff]
    %v647 = vld [vmem:[#allocation3 + $0x10] sm:$0xff]
    %648 = vmatprep.subr.mxu0 %v597
    %649 = vmatpush1.msra.mxu0 %v596
    %650 = vmatprep.subr.mxu0 %v600
    %651 = vmatpush1.msra.mxu0 %v599
    %652 = vmatprep.subr.mxu0 %v603
    %653 = vmatpush1.msra.mxu0 %v602
    %654 = vmatprep.subr.mxu0 %v606
    %655 = vmatpush1.msra.mxu0 %v605
    %656 = vmatprep.subr.mxu0 %v609
    %657 = vmatpush1.msra.mxu0 %v608
    %658 = vmatprep.subr.mxu0 %v612
    %659 = vmatpush1.msra.mxu0 %v611
    %660 = vmatprep.subr.mxu0 %v615
    %661 = vmatpush1.msra.mxu0 %v614
    %662 = vmatprep.subr.mxu0 %v618
    %663 = vmatpush1.msra.mxu0 %v617
    %664 = vmatprep.subr.mxu0 %v621
    %665 = vmatpush1.msra.mxu0 %v620
    %666 = vmatprep.subr.mxu0 %v624
    %667 = vmatpush1.msra.mxu0 %v623
    %668 = vmatprep.subr.mxu0 %v627
    %669 = vmatpush1.msra.mxu0 %v626
    %670 = vmatprep.subr.mxu0 %v630
    %671 = vmatpush1.msra.mxu0 %v629
    %672 = vmatprep.subr.mxu0 %v633
    %673 = vmatpush1.msra.mxu0 %v632
    %674 = vmatprep.subr.mxu0 %v636
    %675 = vmatpush1.msra.mxu0 %v635
    %676 = vmatprep.subr.mxu0 %v639
    %677 = vmatpush1.msra.mxu0 %v638
    %678 = vmatprep.subr.mxu0 %v642
    %679 = vmatpush1.msra.mxu0 %v641
    %680 = vmatprep.subr.mxu0 0.0
    %681 = vmatpush1.msra.mxu0 0.0
    %682 = vmatprep.subr.mxu0 0.0
    %683 = vmatpush1.msra.mxu0 0.0
    %684 = vmatprep.subr.mxu0 0.0
    %685 = vmatpush1.msra.mxu0 0.0
    %686 = vmatprep.subr.mxu0 0.0
    %687 = vmatpush1.msra.mxu0 0.0
    %688 = vmatprep.subr.mxu0 0.0
    %689 = vmatpush1.msra.mxu0 0.0
    %690 = vmatprep.subr.mxu0 0.0
    %691 = vmatpush1.msra.mxu0 0.0
    %692 = vmatprep.subr.mxu0 0.0
    %693 = vmatpush1.msra.mxu0 0.0
    %694 = vmatprep.subr.mxu0 0.0
    %695 = vmatpush1.msra.mxu0 0.0
    %696 = vmatprep.subr.mxu0 0.0
    %697 = vmatpush1.msra.mxu0 0.0
    %698 = vmatprep.subr.mxu0 0.0
    %699 = vmatpush1.msra.mxu0 0.0
    %700 = vmatprep.subr.mxu0 0.0
    %701 = vmatpush1.msra.mxu0 0.0
    %702 = vmatprep.subr.mxu0 0.0
    %703 = vmatpush1.msra.mxu0 0.0
    %704 = vmatprep.subr.mxu0 0.0
    %705 = vmatpush1.msra.mxu0 0.0
    %706 = vmatprep.subr.mxu0 0.0
    %707 = vmatpush1.msra.mxu0 0.0
    %708 = vmatprep.subr.mxu0 0.0
    %709 = vmatpush1.msra.mxu0 0.0
    %710 = vmatprep.subr.mxu0 0.0
    %711 = vmatpush1.msra.mxu0 0.0
    %712 = vmatprep.mubr.f32.mxu0 0.0
    %713 = vmatmul.mubr.f32.gmra.mrb[0].mxu0 %v644
    %v714 = vpop.f32.mrb[0].mxu0
    %v715 = vadd.f32 0.0, %v714
    %v716 = vpop.f32.mrb[0].mxu0
    %v717 = vadd.f32 0.0, %v716
    %718 = vdwg.mxu0
    %719 = vmatprep.subr.mxu0 0.0
    %720 = vmatpush1.msra.mxu0 %v598
    %721 = vmatprep.subr.mxu0 0.0
    %722 = vmatpush1.msra.mxu0 %v601
    %723 = vmatprep.subr.mxu0 0.0
    %724 = vmatpush1.msra.mxu0 %v604
    %725 = vmatprep.subr.mxu0 0.0
    %726 = vmatpush1.msra.mxu0 %v607
    %727 = vmatprep.subr.mxu0 0.0
    %728 = vmatpush1.msra.mxu0 %v610
    %729 = vmatprep.subr.mxu0 0.0
    %730 = vmatpush1.msra.mxu0 %v613
    %731 = vmatprep.subr.mxu0 0.0
    %732 = vmatpush1.msra.mxu0 %v616
    %733 = vmatprep.subr.mxu0 0.0
    %734 = vmatpush1.msra.mxu0 %v619
    %735 = vmatprep.subr.mxu0 0.0
    %736 = vmatpush1.msra.mxu0 %v622
    %737 = vmatprep.subr.mxu0 0.0
    %738 = vmatpush1.msra.mxu0 %v625
    %739 = vmatprep.subr.mxu0 0.0
    %740 = vmatpush1.msra.mxu0 %v628
    %741 = vmatprep.subr.mxu0 0.0
    %742 = vmatpush1.msra.mxu0 %v631
    %743 = vmatprep.subr.mxu0 0.0
    %744 = vmatpush1.msra.mxu0 %v634
    %745 = vmatprep.subr.mxu0 0.0
    %746 = vmatpush1.msra.mxu0 %v637
    %747 = vmatprep.subr.mxu0 0.0
    %748 = vmatpush1.msra.mxu0 %v640
    %749 = vmatprep.subr.mxu0 0.0
    %750 = vmatpush1.msra.mxu0 %v643
    %751 = vmatprep.subr.mxu0 0.0
    %752 = vmatpush1.msra.mxu0 0.0
    %753 = vmatprep.subr.mxu0 0.0
    %754 = vmatpush1.msra.mxu0 0.0
    %755 = vmatprep.subr.mxu0 0.0
    %756 = vmatpush1.msra.mxu0 0.0
    %757 = vmatprep.subr.mxu0 0.0
    %758 = vmatpush1.msra.mxu0 0.0
    %759 = vmatprep.subr.mxu0 0.0
    %760 = vmatpush1.msra.mxu0 0.0
    %761 = vmatprep.subr.mxu0 0.0
    %762 = vmatpush1.msra.mxu0 0.0
    %763 = vmatprep.subr.mxu0 0.0
    %764 = vmatpush1.msra.mxu0 0.0
    %765 = vmatprep.subr.mxu0 0.0
    %766 = vmatpush1.msra.mxu0 0.0
    %767 = vmatprep.subr.mxu0 0.0
    %768 = vmatpush1.msra.mxu0 0.0
    %769 = vmatprep.subr.mxu0 0.0
    %770 = vmatpush1.msra.mxu0 0.0
    %771 = vmatprep.subr.mxu0 0.0
    %772 = vmatpush1.msra.mxu0 0.0
    %773 = vmatprep.subr.mxu0 0.0
    %774 = vmatpush1.msra.mxu0 0.0
    %775 = vmatprep.subr.mxu0 0.0
    %776 = vmatpush1.msra.mxu0 0.0
    %777 = vmatprep.subr.mxu0 0.0
    %778 = vmatpush1.msra.mxu0 0.0
    %779 = vmatprep.subr.mxu0 0.0
    %780 = vmatpush1.msra.mxu0 0.0
    %781 = vmatprep.subr.mxu0 0.0
    %782 = vmatpush1.msra.mxu0 0.0
    %783 = vmatprep.mubr.f32.mxu0 0.0
    %784 = vmatmul.mubr.f32.gmra.mrb[0].mxu0 %v644
    %v785 = vpop.f32.mrb[0].mxu0
    %v786 = vadd.f32 0.0, %v785
    %v787 = vpop.f32.mrb[0].mxu0
    %788 = vdwg.mxu0
    %v789 = vadd.f32 %v645, %v715
    %v790 = vxor.u32 %v789, 2147483648
    %v791 = vmul.f32 %v790, 1.442695
    %v792 = vpow.pop %v791
    %v793 = vadd.f32 %v792, 1.0
    %v794 = vrcp.pop %v793
    %v795 = vmul.f32 1.0, %v794
    %v796 = vadd.f32 %v646, %v717
    %v797 = vxor.u32 %v796, 2147483648
    %v798 = vmul.f32 %v797, 1.442695
    %v799 = vpow.pop %v798
    %v800 = vadd.f32 %v799, 1.0
    %v801 = vrcp.pop %v800
    %v802 = vmul.f32 1.0, %v801
    %v803 = vadd.f32 %v786, %v594
    %v804 = vmul.f32 %v795, %v803
    %v805 = vadd.f32 %v647, %v804
    %v806 = vtanh.pop %v805
    %v807 = vsub.f32 1.0, %v802
    %v808 = vmul.f32 %v807, %v806
    %v809 = vmul.f32 %v802, %v644
    %v810 = vadd.f32 %v808, %v809
    %811 = vst [vmem:[#allocation16] sm:$0xff] %v810
    %s812 = scalar_lea.vmem [#allocation3], 24
    %v813 = vld [vmem:[%s812] sm:$0xff]
    %v814 = vld [vmem:[%s812 + $0x8] sm:$0xff]
    %v815 = vld [vmem:[%s812 + $0x10] sm:$0xff]
    %816 = vmatprep.subr.mxu0 %v597
    %817 = vmatpush1.msra.mxu0 %v596
    %818 = vmatprep.subr.mxu0 %v600
    %819 = vmatpush1.msra.mxu0 %v599
    %820 = vmatprep.subr.mxu0 %v603
    %821 = vmatpush1.msra.mxu0 %v602
    %822 = vmatprep.subr.mxu0 %v606
    %823 = vmatpush1.msra.mxu0 %v605
    %824 = vmatprep.subr.mxu0 %v609
    %825 = vmatpush1.msra.mxu0 %v608
    %826 = vmatprep.subr.mxu0 %v612
    %827 = vmatpush1.msra.mxu0 %v611
    %828 = vmatprep.subr.mxu0 %v615
    %829 = vmatpush1.msra.mxu0 %v614
    %830 = vmatprep.subr.mxu0 %v618
    %831 = vmatpush1.msra.mxu0 %v617
    %832 = vmatprep.subr.mxu0 %v621
    %833 = vmatpush1.msra.mxu0 %v620
    %834 = vmatprep.subr.mxu0 %v624
    %835 = vmatpush1.msra.mxu0 %v623
    %836 = vmatprep.subr.mxu0 %v627
    %837 = vmatpush1.msra.mxu0 %v626
    %838 = vmatprep.subr.mxu0 %v630
    %839 = vmatpush1.msra.mxu0 %v629
    %840 = vmatprep.subr.mxu0 %v633
    %841 = vmatpush1.msra.mxu0 %v632
    %842 = vmatprep.subr.mxu0 %v636
    %843 = vmatpush1.msra.mxu0 %v635
    %844 = vmatprep.subr.mxu0 %v639
    %845 = vmatpush1.msra.mxu0 %v638
    %846 = vmatprep.subr.mxu0 %v642
    %847 = vmatpush1.msra.mxu0 %v641
    %848 = vmatprep.subr.mxu0 0.0
    %849 = vmatpush1.msra.mxu0 0.0
    %850 = vmatprep.subr.mxu0 0.0
    %851 = vmatpush1.msra.mxu0 0.0
    %852 = vmatprep.subr.mxu0 0.0
    %853 = vmatpush1.msra.mxu0 0.0
    %854 = vmatprep.subr.mxu0 0.0
    %855 = vmatpush1.msra.mxu0 0.0
    %856 = vmatprep.subr.mxu0 0.0
    %857 = vmatpush1.msra.mxu0 0.0
    %858 = vmatprep.subr.mxu0 0.0
    %859 = vmatpush1.msra.mxu0 0.0
    %860 = vmatprep.subr.mxu0 0.0
    %861 = vmatpush1.msra.mxu0 0.0
    %862 = vmatprep.subr.mxu0 0.0
    %863 = vmatpush1.msra.mxu0 0.0
    %864 = vmatprep.subr.mxu0 0.0
    %865 = vmatpush1.msra.mxu0 0.0
    %866 = vmatprep.subr.mxu0 0.0
    %867 = vmatpush1.msra.mxu0 0.0
    %868 = vmatprep.subr.mxu0 0.0
    %869 = vmatpush1.msra.mxu0 0.0
    %870 = vmatprep.subr.mxu0 0.0
    %871 = vmatpush1.msra.mxu0 0.0
    %872 = vmatprep.subr.mxu0 0.0
    %873 = vmatpush1.msra.mxu0 0.0
    %874 = vmatprep.subr.mxu0 0.0
    %875 = vmatpush1.msra.mxu0 0.0
    %876 = vmatprep.subr.mxu0 0.0
    %877 = vmatpush1.msra.mxu0 0.0
    %878 = vmatprep.subr.mxu0 0.0
    %879 = vmatpush1.msra.mxu0 0.0
    %880 = vmatprep.mubr.f32.mxu0 0.0
    %881 = vmatmul.mubr.f32.gmra.mrb[0].mxu0 %v810
    %v882 = vpop.f32.mrb[0].mxu0
    %v883 = vadd.f32 0.0, %v882
    %v884 = vpop.f32.mrb[0].mxu0
    %v885 = vadd.f32 0.0, %v884
    %886 = vdwg.mxu0
    %887 = vmatprep.subr.mxu0 0.0
    %888 = vmatpush1.msra.mxu0 %v598
    %889 = vmatprep.subr.mxu0 0.0
    %890 = vmatpush1.msra.mxu0 %v601
    %891 = vmatprep.subr.mxu0 0.0
    %892 = vmatpush1.msra.mxu0 %v604
    %893 = vmatprep.subr.mxu0 0.0
    %894 = vmatpush1.msra.mxu0 %v607
    %895 = vmatprep.subr.mxu0 0.0
    %896 = vmatpush1.msra.mxu0 %v610
    %897 = vmatprep.subr.mxu0 0.0
    %898 = vmatpush1.msra.mxu0 %v613
    %899 = vmatprep.subr.mxu0 0.0
    %900 = vmatpush1.msra.mxu0 %v616
    %901 = vmatprep.subr.mxu0 0.0
    %902 = vmatpush1.msra.mxu0 %v619
    %903 = vmatprep.subr.mxu0 0.0
    %904 = vmatpush1.msra.mxu0 %v622
    %905 = vmatprep.subr.mxu0 0.0
    %906 = vmatpush1.msra.mxu0 %v625
    %907 = vmatprep.subr.mxu0 0.0
    %908 = vmatpush1.msra.mxu0 %v628
    %909 = vmatprep.subr.mxu0 0.0
    %910 = vmatpush1.msra.mxu0 %v631
    %911 = vmatprep.subr.mxu0 0.0
    %912 = vmatpush1.msra.mxu0 %v634
    %913 = vmatprep.subr.mxu0 0.0
    %914 = vmatpush1.msra.mxu0 %v637
    %915 = vmatprep.subr.mxu0 0.0
    %916 = vmatpush1.msra.mxu0 %v640
    %917 = vmatprep.subr.mxu0 0.0
    %918 = vmatpush1.msra.mxu0 %v643
    %919 = vmatprep.subr.mxu0 0.0
    %920 = vmatpush1.msra.mxu0 0.0
    %921 = vmatprep.subr.mxu0 0.0
    %922 = vmatpush1.msra.mxu0 0.0
    %923 = vmatprep.subr.mxu0 0.0
    %924 = vmatpush1.msra.mxu0 0.0
    %925 = vmatprep.subr.mxu0 0.0
    %926 = vmatpush1.msra.mxu0 0.0
    %927 = vmatprep.subr.mxu0 0.0
    %928 = vmatpush1.msra.mxu0 0.0
    %929 = vmatprep.subr.mxu0 0.0
    %930 = vmatpush1.msra.mxu0 0.0
    %931 = vmatprep.subr.mxu0 0.0
    %932 = vmatpush1.msra.mxu0 0.0
    %933 = vmatprep.subr.mxu0 0.0
    %934 = vmatpush1.msra.mxu0 0.0
    %935 = vmatprep.subr.mxu0 0.0
    %936 = vmatpush1.msra.mxu0 0.0
    %937 = vmatprep.subr.mxu0 0.0
    %938 = vmatpush1.msra.mxu0 0.0
    %939 = vmatprep.subr.mxu0 0.0
    %940 = vmatpush1.msra.mxu0 0.0
    %941 = vmatprep.subr.mxu0 0.0
    %942 = vmatpush1.msra.mxu0 0.0
    %943 = vmatprep.subr.mxu0 0.0
    %944 = vmatpush1.msra.mxu0 0.0
    %945 = vmatprep.subr.mxu0 0.0
    %946 = vmatpush1.msra.mxu0 0.0
    %947 = vmatprep.subr.mxu0 0.0
    %948 = vmatpush1.msra.mxu0 0.0
    %949 = vmatprep.subr.mxu0 0.0
    %950 = vmatpush1.msra.mxu0 0.0
    %951 = vmatprep.mubr.f32.mxu0 0.0
    %952 = vmatmul.mubr.f32.gmra.mrb[0].mxu0 %v810
    %v953 = vpop.f32.mrb[0].mxu0
    %v954 = vadd.f32 0.0, %v953
    %v955 = vpop.f32.mrb[0].mxu0
    %956 = vdwg.mxu0
    %v957 = vadd.f32 %v813, %v883
    %v958 = vxor.u32 %v957, 2147483648
    %v959 = vmul.f32 %v958, 1.442695
    %v960 = vpow.pop %v959
    %v961 = vadd.f32 %v960, 1.0
    %v962 = vrcp.pop %v961
    %v963 = vmul.f32 1.0, %v962
    %v964 = vadd.f32 %v814, %v885
    %v965 = vxor.u32 %v964, 2147483648
    %v966 = vmul.f32 %v965, 1.442695
    %v967 = vpow.pop %v966
    %v968 = vadd.f32 %v967, 1.0
    %v969 = vrcp.pop %v968
    %v970 = vmul.f32 1.0, %v969
    %v971 = vadd.f32 %v954, %v594
    %v972 = vmul.f32 %v963, %v971
    %v973 = vadd.f32 %v815, %v972
    %v974 = vtanh.pop %v973
    %v975 = vsub.f32 1.0, %v970
    %v976 = vmul.f32 %v975, %v974
    %v977 = vmul.f32 %v970, %v810
    %v978 = vadd.f32 %v976, %v977
    %s979 = scalar_lea.vmem [#allocation16], 8
    %980 = vst [vmem:[%s979] sm:$0xff] %v978
    %s981 = scalar_lea.vmem [#allocation3], 48
    %v982 = vld [vmem:[%s981] sm:$0xff]
    %v983 = vld [vmem:[%s981 + $0x8] sm:$0xff]
    %v984 = vld [vmem:[%s981 + $0x10] sm:$0xff]
    %985 = vmatprep.subr.mxu0 %v597
    %986 = vmatpush1.msra.mxu0 %v596
    %987 = vmatprep.subr.mxu0 %v600
    %988 = vmatpush1.msra.mxu0 %v599
    %989 = vmatprep.subr.mxu0 %v603
    %990 = vmatpush1.msra.mxu0 %v602
    %991 = vmatprep.subr.mxu0 %v606
    %992 = vmatpush1.msra.mxu0 %v605
    %993 = vmatprep.subr.mxu0 %v609
    %994 = vmatpush1.msra.mxu0 %v608
    %995 = vmatprep.subr.mxu0 %v612
    %996 = vmatpush1.msra.mxu0 %v611
    %997 = vmatprep.subr.mxu0 %v615
    %998 = vmatpush1.msra.mxu0 %v614
    %999 = vmatprep.subr.mxu0 %v618
    %1000 = vmatpush1.msra.mxu0 %v617
    %1001 = vmatprep.subr.mxu0 %v621
    %1002 = vmatpush1.msra.mxu0 %v620
    %1003 = vmatprep.subr.mxu0 %v624
    %1004 = vmatpush1.msra.mxu0 %v623
    %1005 = vmatprep.subr.mxu0 %v627
    %1006 = vmatpush1.msra.mxu0 %v626
    %1007 = vmatprep.subr.mxu0 %v630
    %1008 = vmatpush1.msra.mxu0 %v629
    %1009 = vmatprep.subr.mxu0 %v633
    %1010 = vmatpush1.msra.mxu0 %v632
    %1011 = vmatprep.subr.mxu0 %v636
    %1012 = vmatpush1.msra.mxu0 %v635
    %1013 = vmatprep.subr.mxu0 %v639
    %1014 = vmatpush1.msra.mxu0 %v638
    %1015 = vmatprep.subr.mxu0 %v642
    %1016 = vmatpush1.msra.mxu0 %v641
    %1017 = vmatprep.subr.mxu0 0.0
    %1018 = vmatpush1.msra.mxu0 0.0
    %1019 = vmatprep.subr.mxu0 0.0
    %1020 = vmatpush1.msra.mxu0 0.0
    %1021 = vmatprep.subr.mxu0 0.0
    %1022 = vmatpush1.msra.mxu0 0.0
    %1023 = vmatprep.subr.mxu0 0.0
    %1024 = vmatpush1.msra.mxu0 0.0
    %1025 = vmatprep.subr.mxu0 0.0
    %1026 = vmatpush1.msra.mxu0 0.0
    %1027 = vmatprep.subr.mxu0 0.0
    %1028 = vmatpush1.msra.mxu0 0.0
    %1029 = vmatprep.subr.mxu0 0.0
    %1030 = vmatpush1.msra.mxu0 0.0
    %1031 = vmatprep.subr.mxu0 0.0
    %1032 = vmatpush1.msra.mxu0 0.0
    %1033 = vmatprep.subr.mxu0 0.0
    %1034 = vmatpush1.msra.mxu0 0.0
    %1035 = vmatprep.subr.mxu0 0.0
    %1036 = vmatpush1.msra.mxu0 0.0
    %1037 = vmatprep.subr.mxu0 0.0
    %1038 = vmatpush1.msra.mxu0 0.0
    %1039 = vmatprep.subr.mxu0 0.0
    %1040 = vmatpush1.msra.mxu0 0.0
    %1041 = vmatprep.subr.mxu0 0.0
    %1042 = vmatpush1.msra.mxu0 0.0
    %1043 = vmatprep.subr.mxu0 0.0
    %1044 = vmatpush1.msra.mxu0 0.0
    %1045 = vmatprep.subr.mxu0 0.0
    %1046 = vmatpush1.msra.mxu0 0.0
    %1047 = vmatprep.subr.mxu0 0.0
    %1048 = vmatpush1.msra.mxu0 0.0
    %1049 = vmatprep.mubr.f32.mxu0 0.0
    %1050 = vmatmul.mubr.f32.gmra.mrb[0].mxu0 %v978
    %v1051 = vpop.f32.mrb[0].mxu0
    %v1052 = vadd.f32 0.0, %v1051
    %v1053 = vpop.f32.mrb[0].mxu0
    %v1054 = vadd.f32 0.0, %v1053
    %1055 = vdwg.mxu0
    %1056 = vmatprep.subr.mxu0 0.0
    %1057 = vmatpush1.msra.mxu0 %v598
    %1058 = vmatprep.subr.mxu0 0.0
    %1059 = vmatpush1.msra.mxu0 %v601
    %1060 = vmatprep.subr.mxu0 0.0
    %1061 = vmatpush1.msra.mxu0 %v604
    %1062 = vmatprep.subr.mxu0 0.0
    %1063 = vmatpush1.msra.mxu0 %v607
    %1064 = vmatprep.subr.mxu0 0.0
    %1065 = vmatpush1.msra.mxu0 %v610
    %1066 = vmatprep.subr.mxu0 0.0
    %1067 = vmatpush1.msra.mxu0 %v613
    %1068 = vmatprep.subr.mxu0 0.0
    %1069 = vmatpush1.msra.mxu0 %v616
    %1070 = vmatprep.subr.mxu0 0.0
    %1071 = vmatpush1.msra.mxu0 %v619
    %1072 = vmatprep.subr.mxu0 0.0
    %1073 = vmatpush1.msra.mxu0 %v622
    %1074 = vmatprep.subr.mxu0 0.0
    %1075 = vmatpush1.msra.mxu0 %v625
    %1076 = vmatprep.subr.mxu0 0.0
    %1077 = vmatpush1.msra.mxu0 %v628
    %1078 = vmatprep.subr.mxu0 0.0
    %1079 = vmatpush1.msra.mxu0 %v631
    %1080 = vmatprep.subr.mxu0 0.0
    %1081 = vmatpush1.msra.mxu0 %v634
    %1082 = vmatprep.subr.mxu0 0.0
    %1083 = vmatpush1.msra.mxu0 %v637
    %1084 = vmatprep.subr.mxu0 0.0
    %1085 = vmatpush1.msra.mxu0 %v640
    %1086 = vmatprep.subr.mxu0 0.0
    %1087 = vmatpush1.msra.mxu0 %v643
    %1088 = vmatprep.subr.mxu0 0.0
    %1089 = vmatpush1.msra.mxu0 0.0
    %1090 = vmatprep.subr.mxu0 0.0
    %1091 = vmatpush1.msra.mxu0 0.0
    %1092 = vmatprep.subr.mxu0 0.0
    %1093 = vmatpush1.msra.mxu0 0.0
    %1094 = vmatprep.subr.mxu0 0.0
    %1095 = vmatpush1.msra.mxu0 0.0
    %1096 = vmatprep.subr.mxu0 0.0
    %1097 = vmatpush1.msra.mxu0 0.0
    %1098 = vmatprep.subr.mxu0 0.0
    %1099 = vmatpush1.msra.mxu0 0.0
    %1100 = vmatprep.subr.mxu0 0.0
    %1101 = vmatpush1.msra.mxu0 0.0
    %1102 = vmatprep.subr.mxu0 0.0
    %1103 = vmatpush1.msra.mxu0 0.0
    %1104 = vmatprep.subr.mxu0 0.0
    %1105 = vmatpush1.msra.mxu0 0.0
    %1106 = vmatprep.subr.mxu0 0.0
    %1107 = vmatpush1.msra.mxu0 0.0
    %1108 = vmatprep.subr.mxu0 0.0
    %1109 = vmatpush1.msra.mxu0 0.0
    %1110 = vmatprep.subr.mxu0 0.0
    %1111 = vmatpush1.msra.mxu0 0.0
    %1112 = vmatprep.subr.mxu0 0.0
    %1113 = vmatpush1.msra.mxu0 0.0
    %1114 = vmatprep.subr.mxu0 0.0
    %1115 = vmatpush1.msra.mxu0 0.0
    %1116 = vmatprep.subr.mxu0 0.0
    %1117 = vmatpush1.msra.mxu0 0.0
    %1118 = vmatprep.subr.mxu0 0.0
    %1119 = vmatpush1.msra.mxu0 0.0
    %1120 = vmatprep.mubr.f32.mxu0 0.0
    %1121 = vmatmul.mubr.f32.gmra.mrb[0].mxu0 %v978
    %v1122 = vpop.f32.mrb[0].mxu0
    %v1123 = vadd.f32 0.0, %v1122
    %v1124 = vpop.f32.mrb[0].mxu0
    %1125 = vdwg.mxu0
    %v1126 = vadd.f32 %v982, %v1052
    %v1127 = vxor.u32 %v1126, 2147483648
    %v1128 = vmul.f32 %v1127, 1.442695
    %v1129 = vpow.pop %v1128
    %v1130 = vadd.f32 %v1129, 1.0
    %v1131 = vrcp.pop %v1130
    %v1132 = vmul.f32 1.0, %v1131
    %v1133 = vadd.f32 %v983, %v1054
    %v1134 = vxor.u32 %v1133, 2147483648
    %v1135 = vmul.f32 %v1134, 1.442695
    %v1136 = vpow.pop %v1135
    %v1137 = vadd.f32 %v1136, 1.0
    %v1138 = vrcp.pop %v1137
    %v1139 = vmul.f32 1.0, %v1138
    %v1140 = vadd.f32 %v1123, %v594
    %v1141 = vmul.f32 %v1132, %v1140
    %v1142 = vadd.f32 %v984, %v1141
    %v1143 = vtanh.pop %v1142
    %v1144 = vsub.f32 1.0, %v1139
    %v1145 = vmul.f32 %v1144, %v1143
    %v1146 = vmul.f32 %v1139, %v978
    %v1147 = vadd.f32 %v1145, %v1146
    %s1148 = scalar_lea.vmem [#allocation16], 16
    %1149 = vst [vmem:[%s1148] sm:$0xff] %v1147
    %s1150 = scalar_lea.vmem [#allocation3], 72
    %v1151 = vld [vmem:[%s1150] sm:$0xff]
    %v1152 = vld [vmem:[%s1150 + $0x8] sm:$0xff]
    %v1153 = vld [vmem:[%s1150 + $0x10] sm:$0xff]
    %1154 = vmatprep.subr.mxu0 %v597
    %1155 = vmatpush1.msra.mxu0 %v596
    %1156 = vmatprep.subr.mxu0 %v600
    %1157 = vmatpush1.msra.mxu0 %v599
    %1158 = vmatprep.subr.mxu0 %v603
    %1159 = vmatpush1.msra.mxu0 %v602
    %1160 = vmatprep.subr.mxu0 %v606
    %1161 = vmatpush1.msra.mxu0 %v605
    %1162 = vmatprep.subr.mxu0 %v609
    %1163 = vmatpush1.msra.mxu0 %v608
    %1164 = vmatprep.subr.mxu0 %v612
    %1165 = vmatpush1.msra.mxu0 %v611
    %1166 = vmatprep.subr.mxu0 %v615
    %1167 = vmatpush1.msra.mxu0 %v614
    %1168 = vmatprep.subr.mxu0 %v618
    %1169 = vmatpush1.msra.mxu0 %v617
    %1170 = vmatprep.subr.mxu0 %v621
    %1171 = vmatpush1.msra.mxu0 %v620
    %1172 = vmatprep.subr.mxu0 %v624
    %1173 = vmatpush1.msra.mxu0 %v623
    %1174 = vmatprep.subr.mxu0 %v627
    %1175 = vmatpush1.msra.mxu0 %v626
    %1176 = vmatprep.subr.mxu0 %v630
    %1177 = vmatpush1.msra.mxu0 %v629
    %1178 = vmatprep.subr.mxu0 %v633
    %1179 = vmatpush1.msra.mxu0 %v632
    %1180 = vmatprep.subr.mxu0 %v636
    %1181 = vmatpush1.msra.mxu0 %v635
    %1182 = vmatprep.subr.mxu0 %v639
    %1183 = vmatpush1.msra.mxu0 %v638
    %1184 = vmatprep.subr.mxu0 %v642
    %1185 = vmatpush1.msra.mxu0 %v641
    %1186 = vmatprep.subr.mxu0 0.0
    %1187 = vmatpush1.msra.mxu0 0.0
    %1188 = vmatprep.subr.mxu0 0.0
    %1189 = vmatpush1.msra.mxu0 0.0
    %1190 = vmatprep.subr.mxu0 0.0
    %1191 = vmatpush1.msra.mxu0 0.0
    %1192 = vmatprep.subr.mxu0 0.0
    %1193 = vmatpush1.msra.mxu0 0.0
    %1194 = vmatprep.subr.mxu0 0.0
    %1195 = vmatpush1.msra.mxu0 0.0
    %1196 = vmatprep.subr.mxu0 0.0
    %1197 = vmatpush1.msra.mxu0 0.0
    %1198 = vmatprep.subr.mxu0 0.0
    %1199 = vmatpush1.msra.mxu0 0.0
    %1200 = vmatprep.subr.mxu0 0.0
    %1201 = vmatpush1.msra.mxu0 0.0
    %1202 = vmatprep.subr.mxu0 0.0
    %1203 = vmatpush1.msra.mxu0 0.0
    %1204 = vmatprep.subr.mxu0 0.0
    %1205 = vmatpush1.msra.mxu0 0.0
    %1206 = vmatprep.subr.mxu0 0.0
    %1207 = vmatpush1.msra.mxu0 0.0
    %1208 = vmatprep.subr.mxu0 0.0
    %1209 = vmatpush1.msra.mxu0 0.0
    %1210 = vmatprep.subr.mxu0 0.0
    %1211 = vmatpush1.msra.mxu0 0.0
    %1212 = vmatprep.subr.mxu0 0.0
    %1213 = vmatpush1.msra.mxu0 0.0
    %1214 = vmatprep.subr.mxu0 0.0
    %1215 = vmatpush1.msra.mxu0 0.0
    %1216 = vmatprep.subr.mxu0 0.0
    %1217 = vmatpush1.msra.mxu0 0.0
    %1218 = vmatprep.mubr.f32.mxu0 0.0
    %1219 = vmatmul.mubr.f32.gmra.mrb[0].mxu0 %v1147
    %v1220 = vpop.f32.mrb[0].mxu0
    %v1221 = vadd.f32 0.0, %v1220
    %v1222 = vpop.f32.mrb[0].mxu0
    %v1223 = vadd.f32 0.0, %v1222
    %1224 = vdwg.mxu0
    %1225 = vmatprep.subr.mxu0 0.0
    %1226 = vmatpush1.msra.mxu0 %v598
    %1227 = vmatprep.subr.mxu0 0.0
    %1228 = vmatpush1.msra.mxu0 %v601
    %1229 = vmatprep.subr.mxu0 0.0
    %1230 = vmatpush1.msra.mxu0 %v604
    %1231 = vmatprep.subr.mxu0 0.0
    %1232 = vmatpush1.msra.mxu0 %v607
    %1233 = vmatprep.subr.mxu0 0.0
    %1234 = vmatpush1.msra.mxu0 %v610
    %1235 = vmatprep.subr.mxu0 0.0
    %1236 = vmatpush1.msra.mxu0 %v613
    %1237 = vmatprep.subr.mxu0 0.0
    %1238 = vmatpush1.msra.mxu0 %v616
    %1239 = vmatprep.subr.mxu0 0.0
    %1240 = vmatpush1.msra.mxu0 %v619
    %1241 = vmatprep.subr.mxu0 0.0
    %1242 = vmatpush1.msra.mxu0 %v622
    %1243 = vmatprep.subr.mxu0 0.0
    %1244 = vmatpush1.msra.mxu0 %v625
    %1245 = vmatprep.subr.mxu0 0.0
    %1246 = vmatpush1.msra.mxu0 %v628
    %1247 = vmatprep.subr.mxu0 0.0
    %1248 = vmatpush1.msra.mxu0 %v631
    %1249 = vmatprep.subr.mxu0 0.0
    %1250 = vmatpush1.msra.mxu0 %v634
    %1251 = vmatprep.subr.mxu0 0.0
    %1252 = vmatpush1.msra.mxu0 %v637
    %1253 = vmatprep.subr.mxu0 0.0
    %1254 = vmatpush1.msra.mxu0 %v640
    %1255 = vmatprep.subr.mxu0 0.0
    %1256 = vmatpush1.msra.mxu0 %v643
    %1257 = vmatprep.subr.mxu0 0.0
    %1258 = vmatpush1.msra.mxu0 0.0
    %1259 = vmatprep.subr.mxu0 0.0
    %1260 = vmatpush1.msra.mxu0 0.0
    %1261 = vmatprep.subr.mxu0 0.0
    %1262 = vmatpush1.msra.mxu0 0.0
    %1263 = vmatprep.subr.mxu0 0.0
    %1264 = vmatpush1.msra.mxu0 0.0
    %1265 = vmatprep.subr.mxu0 0.0
    %1266 = vmatpush1.msra.mxu0 0.0
    %1267 = vmatprep.subr.mxu0 0.0
    %1268 = vmatpush1.msra.mxu0 0.0
    %1269 = vmatprep.subr.mxu0 0.0
    %1270 = vmatpush1.msra.mxu0 0.0
    %1271 = vmatprep.subr.mxu0 0.0
    %1272 = vmatpush1.msra.mxu0 0.0
    %1273 = vmatprep.subr.mxu0 0.0
    %1274 = vmatpush1.msra.mxu0 0.0
    %1275 = vmatprep.subr.mxu0 0.0
    %1276 = vmatpush1.msra.mxu0 0.0
    %1277 = vmatprep.subr.mxu0 0.0
    %1278 = vmatpush1.msra.mxu0 0.0
    %1279 = vmatprep.subr.mxu0 0.0
    %1280 = vmatpush1.msra.mxu0 0.0
    %1281 = vmatprep.subr.mxu0 0.0
    %1282 = vmatpush1.msra.mxu0 0.0
    %1283 = vmatprep.subr.mxu0 0.0
    %1284 = vmatpush1.msra.mxu0 0.0
    %1285 = vmatprep.subr.mxu0 0.0
    %1286 = vmatpush1.msra.mxu0 0.0
    %1287 = vmatprep.subr.mxu0 0.0
    %1288 = vmatpush1.msra.mxu0 0.0
    %1289 = vmatprep.mubr.f32.mxu0 0.0
    %1290 = vmatmul.mubr.f32.gmra.mrb[0].mxu0 %v1147
    %v1291 = vpop.f32.mrb[0].mxu0
    %v1292 = vadd.f32 0.0, %v1291
    %v1293 = vpop.f32.mrb[0].mxu0
    %1294 = vdwg.mxu0
    %v1295 = vadd.f32 %v1151, %v1221
    %v1296 = vxor.u32 %v1295, 2147483648
    %v1297 = vmul.f32 %v1296, 1.442695
    %v1298 = vpow.pop %v1297
    %v1299 = vadd.f32 %v1298, 1.0
    %v1300 = vrcp.pop %v1299
    %v1301 = vmul.f32 1.0, %v1300
    %v1302 = vadd.f32 %v1152, %v1223
    %v1303 = vxor.u32 %v1302, 2147483648
    %v1304 = vmul.f32 %v1303, 1.442695
    %v1305 = vpow.pop %v1304
    %v1306 = vadd.f32 %v1305, 1.0
    %v1307 = vrcp.pop %v1306
    %v1308 = vmul.f32 1.0, %v1307
    %v1309 = vadd.f32 %v1292, %v594
    %v1310 = vmul.f32 %v1301, %v1309
    %v1311 = vadd.f32 %v1153, %v1310
    %v1312 = vtanh.pop %v1311
    %v1313 = vsub.f32 1.0, %v1308
    %v1314 = vmul.f32 %v1313, %v1312
    %v1315 = vmul.f32 %v1308, %v1147
    %v1316 = vadd.f32 %v1314, %v1315
    %s1317 = scalar_lea.vmem [#allocation16], 24
    %1318 = vst [vmem:[%s1317] sm:$0xff] %v1316
    %s1319 = scalar_lea.vmem [#allocation3], 96
    %v1320 = vld [vmem:[%s1319] sm:$0xff]
    %v1321 = vld [vmem:[%s1319 + $0x8] sm:$0xff]
    %v1322 = vld [vmem:[%s1319 + $0x10] sm:$0xff]
    %1323 = vmatprep.subr.mxu0 %v597
    %1324 = vmatpush1.msra.mxu0 %v596
    %1325 = vmatprep.subr.mxu0 %v600
    %1326 = vmatpush1.msra.mxu0 %v599
    %1327 = vmatprep.subr.mxu0 %v603
    %1328 = vmatpush1.msra.mxu0 %v602
    %1329 = vmatprep.subr.mxu0 %v606
    %1330 = vmatpush1.msra.mxu0 %v605
    %1331 = vmatprep.subr.mxu0 %v609
    %1332 = vmatpush1.msra.mxu0 %v608
    %1333 = vmatprep.subr.mxu0 %v612
    %1334 = vmatpush1.msra.mxu0 %v611
    %1335 = vmatprep.subr.mxu0 %v615
    %1336 = vmatpush1.msra.mxu0 %v614
    %1337 = vmatprep.subr.mxu0 %v618
    %1338 = vmatpush1.msra.mxu0 %v617
    %1339 = vmatprep.subr.mxu0 %v621
    %1340 = vmatpush1.msra.mxu0 %v620
    %1341 = vmatprep.subr.mxu0 %v624
    %1342 = vmatpush1.msra.mxu0 %v623
    %1343 = vmatprep.subr.mxu0 %v627
    %1344 = vmatpush1.msra.mxu0 %v626
    %1345 = vmatprep.subr.mxu0 %v630
    %1346 = vmatpush1.msra.mxu0 %v629
    %1347 = vmatprep.subr.mxu0 %v633
    %1348 = vmatpush1.msra.mxu0 %v632
    %1349 = vmatprep.subr.mxu0 %v636
    %1350 = vmatpush1.msra.mxu0 %v635
    %1351 = vmatprep.subr.mxu0 %v639
    %1352 = vmatpush1.msra.mxu0 %v638
    %1353 = vmatprep.subr.mxu0 %v642
    %1354 = vmatpush1.msra.mxu0 %v641
    %1355 = vmatprep.subr.mxu0 0.0
    %1356 = vmatpush1.msra.mxu0 0.0
    %1357 = vmatprep.subr.mxu0 0.0
    %1358 = vmatpush1.msra.mxu0 0.0
    %1359 = vmatprep.subr.mxu0 0.0
    %1360 = vmatpush1.msra.mxu0 0.0
    %1361 = vmatprep.subr.mxu0 0.0
    %1362 = vmatpush1.msra.mxu0 0.0
    %1363 = vmatprep.subr.mxu0 0.0
    %1364 = vmatpush1.msra.mxu0 0.0
    %1365 = vmatprep.subr.mxu0 0.0
    %1366 = vmatpush1.msra.mxu0 0.0
    %1367 = vmatprep.subr.mxu0 0.0
    %1368 = vmatpush1.msra.mxu0 0.0
    %1369 = vmatprep.subr.mxu0 0.0
    %1370 = vmatpush1.msra.mxu0 0.0
    %1371 = vmatprep.subr.mxu0 0.0
    %1372 = vmatpush1.msra.mxu0 0.0
    %1373 = vmatprep.subr.mxu0 0.0
    %1374 = vmatpush1.msra.mxu0 0.0
    %1375 = vmatprep.subr.mxu0 0.0
    %1376 = vmatpush1.msra.mxu0 0.0
    %1377 = vmatprep.subr.mxu0 0.0
    %1378 = vmatpush1.msra.mxu0 0.0
    %1379 = vmatprep.subr.mxu0 0.0
    %1380 = vmatpush1.msra.mxu0 0.0
    %1381 = vmatprep.subr.mxu0 0.0
    %1382 = vmatpush1.msra.mxu0 0.0
    %1383 = vmatprep.subr.mxu0 0.0
    %1384 = vmatpush1.msra.mxu0 0.0
    %1385 = vmatprep.subr.mxu0 0.0
    %1386 = vmatpush1.msra.mxu0 0.0
    %1387 = vmatprep.mubr.f32.mxu0 0.0
    %1388 = vmatmul.mubr.f32.gmra.mrb[0].mxu0 %v1316
    %v1389 = vpop.f32.mrb[0].mxu0
    %v1390 = vadd.f32 0.0, %v1389
    %v1391 = vpop.f32.mrb[0].mxu0
    %v1392 = vadd.f32 0.0, %v1391
    %1393 = vdwg.mxu0
    %1394 = vmatprep.subr.mxu0 0.0
    %1395 = vmatpush1.msra.mxu0 %v598
    %1396 = vmatprep.subr.mxu0 0.0
    %1397 = vmatpush1.msra.mxu0 %v601
    %1398 = vmatprep.subr.mxu0 0.0
    %1399 = vmatpush1.msra.mxu0 %v604
    %1400 = vmatprep.subr.mxu0 0.0
    %1401 = vmatpush1.msra.mxu0 %v607
    %1402 = vmatprep.subr.mxu0 0.0
    %1403 = vmatpush1.msra.mxu0 %v610
    %1404 = vmatprep.subr.mxu0 0.0
    %1405 = vmatpush1.msra.mxu0 %v613
    %1406 = vmatprep.subr.mxu0 0.0
    %1407 = vmatpush1.msra.mxu0 %v616
    %1408 = vmatprep.subr.mxu0 0.0
    %1409 = vmatpush1.msra.mxu0 %v619
    %1410 = vmatprep.subr.mxu0 0.0
    %1411 = vmatpush1.msra.mxu0 %v622
    %1412 = vmatprep.subr.mxu0 0.0
    %1413 = vmatpush1.msra.mxu0 %v625
    %1414 = vmatprep.subr.mxu0 0.0
    %1415 = vmatpush1.msra.mxu0 %v628
    %1416 = vmatprep.subr.mxu0 0.0
    %1417 = vmatpush1.msra.mxu0 %v631
    %1418 = vmatprep.subr.mxu0 0.0
    %1419 = vmatpush1.msra.mxu0 %v634
    %1420 = vmatprep.subr.mxu0 0.0
    %1421 = vmatpush1.msra.mxu0 %v637
    %1422 = vmatprep.subr.mxu0 0.0
    %1423 = vmatpush1.msra.mxu0 %v640
    %1424 = vmatprep.subr.mxu0 0.0
    %1425 = vmatpush1.msra.mxu0 %v643
    %1426 = vmatprep.subr.mxu0 0.0
    %1427 = vmatpush1.msra.mxu0 0.0
    %1428 = vmatprep.subr.mxu0 0.0
    %1429 = vmatpush1.msra.mxu0 0.0
    %1430 = vmatprep.subr.mxu0 0.0
    %1431 = vmatpush1.msra.mxu0 0.0
    %1432 = vmatprep.subr.mxu0 0.0
    %1433 = vmatpush1.msra.mxu0 0.0
    %1434 = vmatprep.subr.mxu0 0.0
    %1435 = vmatpush1.msra.mxu0 0.0
    %1436 = vmatprep.subr.mxu0 0.0
    %1437 = vmatpush1.msra.mxu0 0.0
    %1438 = vmatprep.subr.mxu0 0.0
    %1439 = vmatpush1.msra.mxu0 0.0
    %1440 = vmatprep.subr.mxu0 0.0
    %1441 = vmatpush1.msra.mxu0 0.0
    %1442 = vmatprep.subr.mxu0 0.0
    %1443 = vmatpush1.msra.mxu0 0.0
    %1444 = vmatprep.subr.mxu0 0.0
    %1445 = vmatpush1.msra.mxu0 0.0
    %1446 = vmatprep.subr.mxu0 0.0
    %1447 = vmatpush1.msra.mxu0 0.0
    %1448 = vmatprep.subr.mxu0 0.0
    %1449 = vmatpush1.msra.mxu0 0.0
    %1450 = vmatprep.subr.mxu0 0.0
    %1451 = vmatpush1.msra.mxu0 0.0
    %1452 = vmatprep.subr.mxu0 0.0
    %1453 = vmatpush1.msra.mxu0 0.0
    %1454 = vmatprep.subr.mxu0 0.0
    %1455 = vmatpush1.msra.mxu0 0.0
    %1456 = vmatprep.subr.mxu0 0.0
    %1457 = vmatpush1.msra.mxu0 0.0
    %1458 = vmatprep.mubr.f32.mxu0 0.0
    %1459 = vmatmul.mubr.f32.gmra.mrb[0].mxu0 %v1316
    %v1460 = vpop.f32.mrb[0].mxu0
    %v1461 = vadd.f32 0.0, %v1460
    %v1462 = vpop.f32.mrb[0].mxu0
    %1463 = vdwg.mxu0
    %v1464 = vadd.f32 %v1320, %v1390
    %v1465 = vxor.u32 %v1464, 2147483648
    %v1466 = vmul.f32 %v1465, 1.442695
    %v1467 = vpow.pop %v1466
    %v1468 = vadd.f32 %v1467, 1.0
    %v1469 = vrcp.pop %v1468
    %v1470 = vmul.f32 1.0, %v1469
    %v1471 = vadd.f32 %v1321, %v1392
    %v1472 = vxor.u32 %v1471, 2147483648
    %v1473 = vmul.f32 %v1472, 1.442695
    %v1474 = vpow.pop %v1473
    %v1475 = vadd.f32 %v1474, 1.0
    %v1476 = vrcp.pop %v1475
    %v1477 = vmul.f32 1.0, %v1476
    %v1478 = vadd.f32 %v1461, %v594
    %v1479 = vmul.f32 %v1470, %v1478
    %v1480 = vadd.f32 %v1322, %v1479
    %v1481 = vtanh.pop %v1480
    %v1482 = vsub.f32 1.0, %v1477
    %v1483 = vmul.f32 %v1482, %v1481
    %v1484 = vmul.f32 %v1477, %v1316
    %v1485 = vadd.f32 %v1483, %v1484
    %s1486 = scalar_lea.vmem [#allocation16], 32
    %1487 = vst [vmem:[%s1486] sm:$0xff] %v1485
    %s1488 = scalar_lea.vmem [#allocation3], 120
    %v1489 = vld [vmem:[%s1488] sm:$0xff]
    %v1490 = vld [vmem:[%s1488 + $0x8] sm:$0xff]
    %v1491 = vld [vmem:[%s1488 + $0x10] sm:$0xff]
    %1492 = vmatprep.subr.mxu0 %v597
    %1493 = vmatpush1.msra.mxu0 %v596
    %1494 = vmatprep.subr.mxu0 %v600
    %1495 = vmatpush1.msra.mxu0 %v599
    %1496 = vmatprep.subr.mxu0 %v603
    %1497 = vmatpush1.msra.mxu0 %v602
    %1498 = vmatprep.subr.mxu0 %v606
    %1499 = vmatpush1.msra.mxu0 %v605
    %1500 = vmatprep.subr.mxu0 %v609
    %1501 = vmatpush1.msra.mxu0 %v608
    %1502 = vmatprep.subr.mxu0 %v612
    %1503 = vmatpush1.msra.mxu0 %v611
    %1504 = vmatprep.subr.mxu0 %v615
    %1505 = vmatpush1.msra.mxu0 %v614
    %1506 = vmatprep.subr.mxu0 %v618
    %1507 = vmatpush1.msra.mxu0 %v617
    %1508 = vmatprep.subr.mxu0 %v621
    %1509 = vmatpush1.msra.mxu0 %v620
    %1510 = vmatprep.subr.mxu0 %v624
    %1511 = vmatpush1.msra.mxu0 %v623
    %1512 = vmatprep.subr.mxu0 %v627
    %1513 = vmatpush1.msra.mxu0 %v626
    %1514 = vmatprep.subr.mxu0 %v630
    %1515 = vmatpush1.msra.mxu0 %v629
    %1516 = vmatprep.subr.mxu0 %v633
    %1517 = vmatpush1.msra.mxu0 %v632
    %1518 = vmatprep.subr.mxu0 %v636
    %1519 = vmatpush1.msra.mxu0 %v635
    %1520 = vmatprep.subr.mxu0 %v639
    %1521 = vmatpush1.msra.mxu0 %v638
    %1522 = vmatprep.subr.mxu0 %v642
    %1523 = vmatpush1.msra.mxu0 %v641
    %1524 = vmatprep.subr.mxu0 0.0
    %1525 = vmatpush1.msra.mxu0 0.0
    %1526 = vmatprep.subr.mxu0 0.0
    %1527 = vmatpush1.msra.mxu0 0.0
    %1528 = vmatprep.subr.mxu0 0.0
    %1529 = vmatpush1.msra.mxu0 0.0
    %1530 = vmatprep.subr.mxu0 0.0
    %1531 = vmatpush1.msra.mxu0 0.0
    %1532 = vmatprep.subr.mxu0 0.0
    %1533 = vmatpush1.msra.mxu0 0.0
    %1534 = vmatprep.subr.mxu0 0.0
    %1535 = vmatpush1.msra.mxu0 0.0
    %1536 = vmatprep.subr.mxu0 0.0
    %1537 = vmatpush1.msra.mxu0 0.0
    %1538 = vmatprep.subr.mxu0 0.0
    %1539 = vmatpush1.msra.mxu0 0.0
    %1540 = vmatprep.subr.mxu0 0.0
    %1541 = vmatpush1.msra.mxu0 0.0
    %1542 = vmatprep.subr.mxu0 0.0
    %1543 = vmatpush1.msra.mxu0 0.0
    %1544 = vmatprep.subr.mxu0 0.0
    %1545 = vmatpush1.msra.mxu0 0.0
    %1546 = vmatprep.subr.mxu0 0.0
    %1547 = vmatpush1.msra.mxu0 0.0
    %1548 = vmatprep.subr.mxu0 0.0
    %1549 = vmatpush1.msra.mxu0 0.0
    %1550 = vmatprep.subr.mxu0 0.0
    %1551 = vmatpush1.msra.mxu0 0.0
    %1552 = vmatprep.subr.mxu0 0.0
    %1553 = vmatpush1.msra.mxu0 0.0
    %1554 = vmatprep.subr.mxu0 0.0
    %1555 = vmatpush1.msra.mxu0 0.0
    %1556 = vmatprep.mubr.f32.mxu0 0.0
    %1557 = vmatmul.mubr.f32.gmra.mrb[0].mxu0 %v1485
    %v1558 = vpop.f32.mrb[0].mxu0
    %v1559 = vadd.f32 0.0, %v1558
    %v1560 = vpop.f32.mrb[0].mxu0
    %v1561 = vadd.f32 0.0, %v1560
    %1562 = vdwg.mxu0
    %1563 = vmatprep.subr.mxu0 0.0
    %1564 = vmatpush1.msra.mxu0 %v598
    %1565 = vmatprep.subr.mxu0 0.0
    %1566 = vmatpush1.msra.mxu0 %v601
    %1567 = vmatprep.subr.mxu0 0.0
    %1568 = vmatpush1.msra.mxu0 %v604
    %1569 = vmatprep.subr.mxu0 0.0
    %1570 = vmatpush1.msra.mxu0 %v607
    %1571 = vmatprep.subr.mxu0 0.0
    %1572 = vmatpush1.msra.mxu0 %v610
    %1573 = vmatprep.subr.mxu0 0.0
    %1574 = vmatpush1.msra.mxu0 %v613
    %1575 = vmatprep.subr.mxu0 0.0
    %1576 = vmatpush1.msra.mxu0 %v616
    %1577 = vmatprep.subr.mxu0 0.0
    %1578 = vmatpush1.msra.mxu0 %v619
    %1579 = vmatprep.subr.mxu0 0.0
    %1580 = vmatpush1.msra.mxu0 %v622
    %1581 = vmatprep.subr.mxu0 0.0
    %1582 = vmatpush1.msra.mxu0 %v625
    %1583 = vmatprep.subr.mxu0 0.0
    %1584 = vmatpush1.msra.mxu0 %v628
    %1585 = vmatprep.subr.mxu0 0.0
    %1586 = vmatpush1.msra.mxu0 %v631
    %1587 = vmatprep.subr.mxu0 0.0
    %1588 = vmatpush1.msra.mxu0 %v634
    %1589 = vmatprep.subr.mxu0 0.0
    %1590 = vmatpush1.msra.mxu0 %v637
    %1591 = vmatprep.subr.mxu0 0.0
    %1592 = vmatpush1.msra.mxu0 %v640
    %1593 = vmatprep.subr.mxu0 0.0
    %1594 = vmatpush1.msra.mxu0 %v643
    %1595 = vmatprep.subr.mxu0 0.0
    %1596 = vmatpush1.msra.mxu0 0.0
    %1597 = vmatprep.subr.mxu0 0.0
    %1598 = vmatpush1.msra.mxu0 0.0
    %1599 = vmatprep.subr.mxu0 0.0
    %1600 = vmatpush1.msra.mxu0 0.0
    %1601 = vmatprep.subr.mxu0 0.0
    %1602 = vmatpush1.msra.mxu0 0.0
    %1603 = vmatprep.subr.mxu0 0.0
    %1604 = vmatpush1.msra.mxu0 0.0
    %1605 = vmatprep.subr.mxu0 0.0
    %1606 = vmatpush1.msra.mxu0 0.0
    %1607 = vmatprep.subr.mxu0 0.0
    %1608 = vmatpush1.msra.mxu0 0.0
    %1609 = vmatprep.subr.mxu0 0.0
    %1610 = vmatpush1.msra.mxu0 0.0
    %1611 = vmatprep.subr.mxu0 0.0
    %1612 = vmatpush1.msra.mxu0 0.0
    %1613 = vmatprep.subr.mxu0 0.0
    %1614 = vmatpush1.msra.mxu0 0.0
    %1615 = vmatprep.subr.mxu0 0.0
    %1616 = vmatpush1.msra.mxu0 0.0
    %1617 = vmatprep.subr.mxu0 0.0
    %1618 = vmatpush1.msra.mxu0 0.0
    %1619 = vmatprep.subr.mxu0 0.0
    %1620 = vmatpush1.msra.mxu0 0.0
    %1621 = vmatprep.subr.mxu0 0.0
    %1622 = vmatpush1.msra.mxu0 0.0
    %1623 = vmatprep.subr.mxu0 0.0
    %1624 = vmatpush1.msra.mxu0 0.0
    %1625 = vmatprep.subr.mxu0 0.0
    %1626 = vmatpush1.msra.mxu0 0.0
    %1627 = vmatprep.mubr.f32.mxu0 0.0
    %1628 = vmatmul.mubr.f32.gmra.mrb[0].mxu0 %v1485
    %v1629 = vpop.f32.mrb[0].mxu0
    %v1630 = vadd.f32 0.0, %v1629
    %v1631 = vpop.f32.mrb[0].mxu0
    %1632 = vdwg.mxu0
    %v1633 = vadd.f32 %v1489, %v1559
    %v1634 = vxor.u32 %v1633, 2147483648
    %v1635 = vmul.f32 %v1634, 1.442695
    %v1636 = vpow.pop %v1635
    %v1637 = vadd.f32 %v1636, 1.0
    %v1638 = vrcp.pop %v1637
    %v1639 = vmul.f32 1.0, %v1638
    %v1640 = vadd.f32 %v1490, %v1561
    %v1641 = vxor.u32 %v1640, 2147483648
    %v1642 = vmul.f32 %v1641, 1.442695
    %v1643 = vpow.pop %v1642
    %v1644 = vadd.f32 %v1643, 1.0
    %v1645 = vrcp.pop %v1644
    %v1646 = vmul.f32 1.0, %v1645
    %v1647 = vadd.f32 %v1630, %v594
    %v1648 = vmul.f32 %v1639, %v1647
    %v1649 = vadd.f32 %v1491, %v1648
    %v1650 = vtanh.pop %v1649
    %v1651 = vsub.f32 1.0, %v1646
    %v1652 = vmul.f32 %v1651, %v1650
    %v1653 = vmul.f32 %v1646, %v1485
    %v1654 = vadd.f32 %v1652, %v1653
    %s1655 = scalar_lea.vmem [#allocation16], 40
    %1656 = vst [vmem:[%s1655] sm:$0xff] %v1654
    %s1657 = scalar_lea.vmem [#allocation3], 144
    %v1658 = vld [vmem:[%s1657] sm:$0xff]
    %v1659 = vld [vmem:[%s1657 + $0x8] sm:$0xff]
    %v1660 = vld [vmem:[%s1657 + $0x10] sm:$0xff]
    %1661 = vmatprep.subr.mxu0 %v597
    %1662 = vmatpush1.msra.mxu0 %v596
    %1663 = vmatprep.subr.mxu0 %v600
    %1664 = vmatpush1.msra.mxu0 %v599
    %1665 = vmatprep.subr.mxu0 %v603
    %1666 = vmatpush1.msra.mxu0 %v602
    %1667 = vmatprep.subr.mxu0 %v606
    %1668 = vmatpush1.msra.mxu0 %v605
    %1669 = vmatprep.subr.mxu0 %v609
    %1670 = vmatpush1.msra.mxu0 %v608
    %1671 = vmatprep.subr.mxu0 %v612
    %1672 = vmatpush1.msra.mxu0 %v611
    %1673 = vmatprep.subr.mxu0 %v615
    %1674 = vmatpush1.msra.mxu0 %v614
    %1675 = vmatprep.subr.mxu0 %v618
    %1676 = vmatpush1.msra.mxu0 %v617
    %1677 = vmatprep.subr.mxu0 %v621
    %1678 = vmatpush1.msra.mxu0 %v620
    %1679 = vmatprep.subr.mxu0 %v624
    %1680 = vmatpush1.msra.mxu0 %v623
    %1681 = vmatprep.subr.mxu0 %v627
    %1682 = vmatpush1.msra.mxu0 %v626
    %1683 = vmatprep.subr.mxu0 %v630
    %1684 = vmatpush1.msra.mxu0 %v629
    %1685 = vmatprep.subr.mxu0 %v633
    %1686 = vmatpush1.msra.mxu0 %v632
    %1687 = vmatprep.subr.mxu0 %v636
    %1688 = vmatpush1.msra.mxu0 %v635
    %1689 = vmatprep.subr.mxu0 %v639
    %1690 = vmatpush1.msra.mxu0 %v638
    %1691 = vmatprep.subr.mxu0 %v642
    %1692 = vmatpush1.msra.mxu0 %v641
    %1693 = vmatprep.subr.mxu0 0.0
    %1694 = vmatpush1.msra.mxu0 0.0
    %1695 = vmatprep.subr.mxu0 0.0
    %1696 = vmatpush1.msra.mxu0 0.0
    %1697 = vmatprep.subr.mxu0 0.0
    %1698 = vmatpush1.msra.mxu0 0.0
    %1699 = vmatprep.subr.mxu0 0.0
    %1700 = vmatpush1.msra.mxu0 0.0
    %1701 = vmatprep.subr.mxu0 0.0
    %1702 = vmatpush1.msra.mxu0 0.0
    %1703 = vmatprep.subr.mxu0 0.0
    %1704 = vmatpush1.msra.mxu0 0.0
    %1705 = vmatprep.subr.mxu0 0.0
    %1706 = vmatpush1.msra.mxu0 0.0
    %1707 = vmatprep.subr.mxu0 0.0
    %1708 = vmatpush1.msra.mxu0 0.0
    %1709 = vmatprep.subr.mxu0 0.0
    %1710 = vmatpush1.msra.mxu0 0.0
    %1711 = vmatprep.subr.mxu0 0.0
    %1712 = vmatpush1.msra.mxu0 0.0
    %1713 = vmatprep.subr.mxu0 0.0
    %1714 = vmatpush1.msra.mxu0 0.0
    %1715 = vmatprep.subr.mxu0 0.0
    %1716 = vmatpush1.msra.mxu0 0.0
    %1717 = vmatprep.subr.mxu0 0.0
    %1718 = vmatpush1.msra.mxu0 0.0
    %1719 = vmatprep.subr.mxu0 0.0
    %1720 = vmatpush1.msra.mxu0 0.0
    %1721 = vmatprep.subr.mxu0 0.0
    %1722 = vmatpush1.msra.mxu0 0.0
    %1723 = vmatprep.subr.mxu0 0.0
    %1724 = vmatpush1.msra.mxu0 0.0
    %1725 = vmatprep.mubr.f32.mxu0 0.0
    %1726 = vmatmul.mubr.f32.gmra.mrb[0].mxu0 %v1654
    %v1727 = vpop.f32.mrb[0].mxu0
    %v1728 = vadd.f32 0.0, %v1727
    %v1729 = vpop.f32.mrb[0].mxu0
    %v1730 = vadd.f32 0.0, %v1729
    %1731 = vdwg.mxu0
    %1732 = vmatprep.subr.mxu0 0.0
    %1733 = vmatpush1.msra.mxu0 %v598
    %1734 = vmatprep.subr.mxu0 0.0
    %1735 = vmatpush1.msra.mxu0 %v601
    %1736 = vmatprep.subr.mxu0 0.0
    %1737 = vmatpush1.msra.mxu0 %v604
    %1738 = vmatprep.subr.mxu0 0.0
    %1739 = vmatpush1.msra.mxu0 %v607
    %1740 = vmatprep.subr.mxu0 0.0
    %1741 = vmatpush1.msra.mxu0 %v610
    %1742 = vmatprep.subr.mxu0 0.0
    %1743 = vmatpush1.msra.mxu0 %v613
    %1744 = vmatprep.subr.mxu0 0.0
    %1745 = vmatpush1.msra.mxu0 %v616
    %1746 = vmatprep.subr.mxu0 0.0
    %1747 = vmatpush1.msra.mxu0 %v619
    %1748 = vmatprep.subr.mxu0 0.0
    %1749 = vmatpush1.msra.mxu0 %v622
    %1750 = vmatprep.subr.mxu0 0.0
    %1751 = vmatpush1.msra.mxu0 %v625
    %1752 = vmatprep.subr.mxu0 0.0
    %1753 = vmatpush1.msra.mxu0 %v628
    %1754 = vmatprep.subr.mxu0 0.0
    %1755 = vmatpush1.msra.mxu0 %v631
    %1756 = vmatprep.subr.mxu0 0.0
    %1757 = vmatpush1.msra.mxu0 %v634
    %1758 = vmatprep.subr.mxu0 0.0
    %1759 = vmatpush1.msra.mxu0 %v637
    %1760 = vmatprep.subr.mxu0 0.0
    %1761 = vmatpush1.msra.mxu0 %v640
    %1762 = vmatprep.subr.mxu0 0.0
    %1763 = vmatpush1.msra.mxu0 %v643
    %1764 = vmatprep.subr.mxu0 0.0
    %1765 = vmatpush1.msra.mxu0 0.0
    %1766 = vmatprep.subr.mxu0 0.0
    %1767 = vmatpush1.msra.mxu0 0.0
    %1768 = vmatprep.subr.mxu0 0.0
    %1769 = vmatpush1.msra.mxu0 0.0
    %1770 = vmatprep.subr.mxu0 0.0
    %1771 = vmatpush1.msra.mxu0 0.0
    %1772 = vmatprep.subr.mxu0 0.0
    %1773 = vmatpush1.msra.mxu0 0.0
    %1774 = vmatprep.subr.mxu0 0.0
    %1775 = vmatpush1.msra.mxu0 0.0
    %1776 = vmatprep.subr.mxu0 0.0
    %1777 = vmatpush1.msra.mxu0 0.0
    %1778 = vmatprep.subr.mxu0 0.0
    %1779 = vmatpush1.msra.mxu0 0.0
    %1780 = vmatprep.subr.mxu0 0.0
    %1781 = vmatpush1.msra.mxu0 0.0
    %1782 = vmatprep.subr.mxu0 0.0
    %1783 = vmatpush1.msra.mxu0 0.0
    %1784 = vmatprep.subr.mxu0 0.0
    %1785 = vmatpush1.msra.mxu0 0.0
    %1786 = vmatprep.subr.mxu0 0.0
    %1787 = vmatpush1.msra.mxu0 0.0
    %1788 = vmatprep.subr.mxu0 0.0
    %1789 = vmatpush1.msra.mxu0 0.0
    %1790 = vmatprep.subr.mxu0 0.0
    %1791 = vmatpush1.msra.mxu0 0.0
    %1792 = vmatprep.subr.mxu0 0.0
    %1793 = vmatpush1.msra.mxu0 0.0
    %1794 = vmatprep.subr.mxu0 0.0
    %1795 = vmatpush1.msra.mxu0 0.0
    %1796 = vmatprep.mubr.f32.mxu0 0.0
    %1797 = vmatmul.mubr.f32.gmra.mrb[0].mxu0 %v1654
    %v1798 = vpop.f32.mrb[0].mxu0
    %v1799 = vadd.f32 0.0, %v1798
    %v1800 = vpop.f32.mrb[0].mxu0
    %1801 = vdwg.mxu0
    %v1802 = vadd.f32 %v1658, %v1728
    %v1803 = vxor.u32 %v1802, 2147483648
    %v1804 = vmul.f32 %v1803, 1.442695
    %v1805 = vpow.pop %v1804
    %v1806 = vadd.f32 %v1805, 1.0
    %v1807 = vrcp.pop %v1806
    %v1808 = vmul.f32 1.0, %v1807
    %v1809 = vadd.f32 %v1659, %v1730
    %v1810 = vxor.u32 %v1809, 2147483648
    %v1811 = vmul.f32 %v1810, 1.442695
    %v1812 = vpow.pop %v1811
    %v1813 = vadd.f32 %v1812, 1.0
    %v1814 = vrcp.pop %v1813
    %v1815 = vmul.f32 1.0, %v1814
    %v1816 = vadd.f32 %v1799, %v594
    %v1817 = vmul.f32 %v1808, %v1816
    %v1818 = vadd.f32 %v1660, %v1817
    %v1819 = vtanh.pop %v1818
    %v1820 = vsub.f32 1.0, %v1815
    %v1821 = vmul.f32 %v1820, %v1819
    %v1822 = vmul.f32 %v1815, %v1654
    %v1823 = vadd.f32 %v1821, %v1822
    %s1824 = scalar_lea.vmem [#allocation16], 48
    %1825 = vst [vmem:[%s1824] sm:$0xff] %v1823
    %s1826 = scalar_lea.vmem [#allocation3], 168
    %v1827 = vld [vmem:[%s1826] sm:$0xff]
    %v1828 = vld [vmem:[%s1826 + $0x8] sm:$0xff]
    %v1829 = vld [vmem:[%s1826 + $0x10] sm:$0xff]
    %1830 = vmatprep.subr.mxu0 %v597
    %1831 = vmatpush1.msra.mxu0 %v596
    %1832 = vmatprep.subr.mxu0 %v600
    %1833 = vmatpush1.msra.mxu0 %v599
    %1834 = vmatprep.subr.mxu0 %v603
    %1835 = vmatpush1.msra.mxu0 %v602
    %1836 = vmatprep.subr.mxu0 %v606
    %1837 = vmatpush1.msra.mxu0 %v605
    %1838 = vmatprep.subr.mxu0 %v609
    %1839 = vmatpush1.msra.mxu0 %v608
    %1840 = vmatprep.subr.mxu0 %v612
    %1841 = vmatpush1.msra.mxu0 %v611
    %1842 = vmatprep.subr.mxu0 %v615
    %1843 = vmatpush1.msra.mxu0 %v614
    %1844 = vmatprep.subr.mxu0 %v618
    %1845 = vmatpush1.msra.mxu0 %v617
    %1846 = vmatprep.subr.mxu0 %v621
    %1847 = vmatpush1.msra.mxu0 %v620
    %1848 = vmatprep.subr.mxu0 %v624
    %1849 = vmatpush1.msra.mxu0 %v623
    %1850 = vmatprep.subr.mxu0 %v627
    %1851 = vmatpush1.msra.mxu0 %v626
    %1852 = vmatprep.subr.mxu0 %v630
    %1853 = vmatpush1.msra.mxu0 %v629
    %1854 = vmatprep.subr.mxu0 %v633
    %1855 = vmatpush1.msra.mxu0 %v632
    %1856 = vmatprep.subr.mxu0 %v636
    %1857 = vmatpush1.msra.mxu0 %v635
    %1858 = vmatprep.subr.mxu0 %v639
    %1859 = vmatpush1.msra.mxu0 %v638
    %1860 = vmatprep.subr.mxu0 %v642
    %1861 = vmatpush1.msra.mxu0 %v641
    %1862 = vmatprep.subr.mxu0 0.0
    %1863 = vmatpush1.msra.mxu0 0.0
    %1864 = vmatprep.subr.mxu0 0.0
    %1865 = vmatpush1.msra.mxu0 0.0
    %1866 = vmatprep.subr.mxu0 0.0
    %1867 = vmatpush1.msra.mxu0 0.0
    %1868 = vmatprep.subr.mxu0 0.0
    %1869 = vmatpush1.msra.mxu0 0.0
    %1870 = vmatprep.subr.mxu0 0.0
    %1871 = vmatpush1.msra.mxu0 0.0
    %1872 = vmatprep.subr.mxu0 0.0
    %1873 = vmatpush1.msra.mxu0 0.0
    %1874 = vmatprep.subr.mxu0 0.0
    %1875 = vmatpush1.msra.mxu0 0.0
    %1876 = vmatprep.subr.mxu0 0.0
    %1877 = vmatpush1.msra.mxu0 0.0
    %1878 = vmatprep.subr.mxu0 0.0
    %1879 = vmatpush1.msra.mxu0 0.0
    %1880 = vmatprep.subr.mxu0 0.0
    %1881 = vmatpush1.msra.mxu0 0.0
    %1882 = vmatprep.subr.mxu0 0.0
    %1883 = vmatpush1.msra.mxu0 0.0
    %1884 = vmatprep.subr.mxu0 0.0
    %1885 = vmatpush1.msra.mxu0 0.0
    %1886 = vmatprep.subr.mxu0 0.0
    %1887 = vmatpush1.msra.mxu0 0.0
    %1888 = vmatprep.subr.mxu0 0.0
    %1889 = vmatpush1.msra.mxu0 0.0
    %1890 = vmatprep.subr.mxu0 0.0
    %1891 = vmatpush1.msra.mxu0 0.0
    %1892 = vmatprep.subr.mxu0 0.0
    %1893 = vmatpush1.msra.mxu0 0.0
    %1894 = vmatprep.mubr.f32.mxu0 0.0
    %1895 = vmatmul.mubr.f32.gmra.mrb[0].mxu0 %v1823
    %v1896 = vpop.f32.mrb[0].mxu0
    %v1897 = vadd.f32 0.0, %v1896
    %v1898 = vpop.f32.mrb[0].mxu0
    %v1899 = vadd.f32 0.0, %v1898
    %1900 = vdwg.mxu0
    %1901 = vmatprep.subr.mxu0 0.0
    %1902 = vmatpush1.msra.mxu0 %v598
    %1903 = vmatprep.subr.mxu0 0.0
    %1904 = vmatpush1.msra.mxu0 %v601
    %1905 = vmatprep.subr.mxu0 0.0
    %1906 = vmatpush1.msra.mxu0 %v604
    %1907 = vmatprep.subr.mxu0 0.0
    %1908 = vmatpush1.msra.mxu0 %v607
    %1909 = vmatprep.subr.mxu0 0.0
    %1910 = vmatpush1.msra.mxu0 %v610
    %1911 = vmatprep.subr.mxu0 0.0
    %1912 = vmatpush1.msra.mxu0 %v613
    %1913 = vmatprep.subr.mxu0 0.0
    %1914 = vmatpush1.msra.mxu0 %v616
    %1915 = vmatprep.subr.mxu0 0.0
    %1916 = vmatpush1.msra.mxu0 %v619
    %1917 = vmatprep.subr.mxu0 0.0
    %1918 = vmatpush1.msra.mxu0 %v622
    %1919 = vmatprep.subr.mxu0 0.0
    %1920 = vmatpush1.msra.mxu0 %v625
    %1921 = vmatprep.subr.mxu0 0.0
    %1922 = vmatpush1.msra.mxu0 %v628
    %1923 = vmatprep.subr.mxu0 0.0
    %1924 = vmatpush1.msra.mxu0 %v631
    %1925 = vmatprep.subr.mxu0 0.0
    %1926 = vmatpush1.msra.mxu0 %v634
    %1927 = vmatprep.subr.mxu0 0.0
    %1928 = vmatpush1.msra.mxu0 %v637
    %1929 = vmatprep.subr.mxu0 0.0
    %1930 = vmatpush1.msra.mxu0 %v640
    %1931 = vmatprep.subr.mxu0 0.0
    %1932 = vmatpush1.msra.mxu0 %v643
    %1933 = vmatprep.subr.mxu0 0.0
    %1934 = vmatpush1.msra.mxu0 0.0
    %1935 = vmatprep.subr.mxu0 0.0
    %1936 = vmatpush1.msra.mxu0 0.0
    %1937 = vmatprep.subr.mxu0 0.0
    %1938 = vmatpush1.msra.mxu0 0.0
    %1939 = vmatprep.subr.mxu0 0.0
    %1940 = vmatpush1.msra.mxu0 0.0
    %1941 = vmatprep.subr.mxu0 0.0
    %1942 = vmatpush1.msra.mxu0 0.0
    %1943 = vmatprep.subr.mxu0 0.0
    %1944 = vmatpush1.msra.mxu0 0.0
    %1945 = vmatprep.subr.mxu0 0.0
    %1946 = vmatpush1.msra.mxu0 0.0
    %1947 = vmatprep.subr.mxu0 0.0
    %1948 = vmatpush1.msra.mxu0 0.0
    %1949 = vmatprep.subr.mxu0 0.0
    %1950 = vmatpush1.msra.mxu0 0.0
    %1951 = vmatprep.subr.mxu0 0.0
    %1952 = vmatpush1.msra.mxu0 0.0
    %1953 = vmatprep.subr.mxu0 0.0
    %1954 = vmatpush1.msra.mxu0 0.0
    %1955 = vmatprep.subr.mxu0 0.0
    %1956 = vmatpush1.msra.mxu0 0.0
    %1957 = vmatprep.subr.mxu0 0.0
    %1958 = vmatpush1.msra.mxu0 0.0
    %1959 = vmatprep.subr.mxu0 0.0
    %1960 = vmatpush1.msra.mxu0 0.0
    %1961 = vmatprep.subr.mxu0 0.0
    %1962 = vmatpush1.msra.mxu0 0.0
    %1963 = vmatprep.subr.mxu0 0.0
    %1964 = vmatpush1.msra.mxu0 0.0
    %1965 = vmatprep.mubr.f32.mxu0 0.0
    %1966 = vmatmul.mubr.f32.gmra.mrb[0].mxu0 %v1823
    %v1967 = vpop.f32.mrb[0].mxu0
    %v1968 = vadd.f32 0.0, %v1967
    %v1969 = vpop.f32.mrb[0].mxu0
    %1970 = vdwg.mxu0
    %v1971 = vadd.f32 %v1827, %v1897
    %v1972 = vxor.u32 %v1971, 2147483648
    %v1973 = vmul.f32 %v1972, 1.442695
    %v1974 = vpow.pop %v1973
    %v1975 = vadd.f32 %v1974, 1.0
    %v1976 = vrcp.pop %v1975
    %v1977 = vmul.f32 1.0, %v1976
    %v1978 = vadd.f32 %v1828, %v1899
    %v1979 = vxor.u32 %v1978, 2147483648
    %v1980 = vmul.f32 %v1979, 1.442695
    %v1981 = vpow.pop %v1980
    %v1982 = vadd.f32 %v1981, 1.0
    %v1983 = vrcp.pop %v1982
    %v1984 = vmul.f32 1.0, %v1983
    %v1985 = vadd.f32 %v1968, %v594
    %v1986 = vmul.f32 %v1977, %v1985
    %v1987 = vadd.f32 %v1829, %v1986
    %v1988 = vtanh.pop %v1987
    %v1989 = vsub.f32 1.0, %v1984
    %v1990 = vmul.f32 %v1989, %v1988
    %v1991 = vmul.f32 %v1984, %v1823
    %v1992 = vadd.f32 %v1990, %v1991
    %s1993 = scalar_lea.vmem [#allocation16], 56
    %1994 = vst [vmem:[%s1993] sm:$0xff] %v1992
    %1995 = vst [vmem:[#allocation2] sm:$0xff] %v1992
    %v1996 = vld [vmem:[#allocation16] sm:$0xff]
    %v1997 = vld [vmem:[#allocation16 + $0x8] sm:$0xff]
    %v1998 = vld [vmem:[#allocation16 + $0x10] sm:$0xff]
    %v1999 = vld [vmem:[#allocation16 + $0x18] sm:$0xff]
    %v2000 = vld [vmem:[#allocation16 + $0x20] sm:$0xff]
    %v2001 = vld [vmem:[#allocation16 + $0x28] sm:$0xff]
    %v2002 = vld [vmem:[#allocation16 + $0x30] sm:$0xff]
    %v2003 = vld [vmem:[#allocation16 + $0x38] sm:$0xff]
    %v2004 = vld [vmem:[#allocation13] sm:$0xff]
    %v2005 = vld [vmem:[#allocation13 + $0x8] sm:$0xff]
    %v2006 = vld [vmem:[#allocation13 + $0x10] sm:$0xff]
    %v2007 = vld [vmem:[#allocation13 + $0x18] sm:$0xff]
    %v2008 = vld [vmem:[#allocation13 + $0x20] sm:$0xff]
    %v2009 = vld [vmem:[#allocation13 + $0x28] sm:$0xff]
    %v2010 = vld [vmem:[#allocation13 + $0x30] sm:$0xff]
    %v2011 = vld [vmem:[#allocation13 + $0x38] sm:$0xff]
    %v2012 = vld [vmem:[#allocation13 + $0x40] sm:$0xff]
    %v2013 = vld [vmem:[#allocation13 + $0x48] sm:$0xff]
    %v2014 = vld [vmem:[#allocation13 + $0x50] sm:$0xff]
    %v2015 = vld [vmem:[#allocation13 + $0x58] sm:$0xff]
    %v2016 = vld [vmem:[#allocation13 + $0x60] sm:$0xff]
    %v2017 = vld [vmem:[#allocation13 + $0x68] sm:$0xff]
    %v2018 = vld [vmem:[#allocation13 + $0x70] sm:$0xff]
    %v2019 = vld [vmem:[#allocation13 + $0x78] sm:$0xff]
    %v2020 = vld [vmem:[%s9] sm:$0x1]
    %v2022 = vlaneseq
    %v2023 = vshrl.u32 %v2022, 7
    %v2024 = vsub.s32 0, %v2023
    %v2025 = vrot.slane %v2020, %v2024
    %2027 = vmatprep.subr.mxu0 0.0
    %2028 = vmatpush1.msra.mxu0 %v2004
    %2029 = vmatprep.subr.mxu0 0.0
    %2030 = vmatpush1.msra.mxu0 %v2005
    %2031 = vmatprep.subr.mxu0 0.0
    %2032 = vmatpush1.msra.mxu0 %v2006
    %2033 = vmatprep.subr.mxu0 0.0
    %2034 = vmatpush1.msra.mxu0 %v2007
    %2035 = vmatprep.subr.mxu0 0.0
    %2036 = vmatpush1.msra.mxu0 %v2008
    %2037 = vmatprep.subr.mxu0 0.0
    %2038 = vmatpush1.msra.mxu0 %v2009
    %2039 = vmatprep.subr.mxu0 0.0
    %2040 = vmatpush1.msra.mxu0 %v2010
    %2041 = vmatprep.subr.mxu0 0.0
    %2042 = vmatpush1.msra.mxu0 %v2011
    %2043 = vmatprep.subr.mxu0 0.0
    %2044 = vmatpush1.msra.mxu0 %v2012
    %2045 = vmatprep.subr.mxu0 0.0
    %2046 = vmatpush1.msra.mxu0 %v2013
    %2047 = vmatprep.subr.mxu0 0.0
    %2048 = vmatpush1.msra.mxu0 %v2014
    %2049 = vmatprep.subr.mxu0 0.0
    %2050 = vmatpush1.msra.mxu0 %v2015
    %2051 = vmatprep.subr.mxu0 0.0
    %2052 = vmatpush1.msra.mxu0 %v2016
    %2053 = vmatprep.subr.mxu0 0.0
    %2054 = vmatpush1.msra.mxu0 %v2017
    %2055 = vmatprep.subr.mxu0 0.0
    %2056 = vmatpush1.msra.mxu0 %v2018
    %2057 = vmatprep.subr.mxu0 0.0
    %2058 = vmatpush1.msra.mxu0 %v2019
    %2059 = vmatprep.subr.mxu0 0.0
    %2060 = vmatpush1.msra.mxu0 0.0
    %2061 = vmatprep.subr.mxu0 0.0
    %2062 = vmatpush1.msra.mxu0 0.0
    %2063 = vmatprep.subr.mxu0 0.0
    %2064 = vmatpush1.msra.mxu0 0.0
    %2065 = vmatprep.subr.mxu0 0.0
    %2066 = vmatpush1.msra.mxu0 0.0
    %2067 = vmatprep.subr.mxu0 0.0
    %2068 = vmatpush1.msra.mxu0 0.0
    %2069 = vmatprep.subr.mxu0 0.0
    %2070 = vmatpush1.msra.mxu0 0.0
    %2071 = vmatprep.subr.mxu0 0.0
    %2072 = vmatpush1.msra.mxu0 0.0
    %2073 = vmatprep.subr.mxu0 0.0
    %2074 = vmatpush1.msra.mxu0 0.0
    %2075 = vmatprep.subr.mxu0 0.0
    %2076 = vmatpush1.msra.mxu0 0.0
    %2077 = vmatprep.subr.mxu0 0.0
    %2078 = vmatpush1.msra.mxu0 0.0
    %2079 = vmatprep.subr.mxu0 0.0
    %2080 = vmatpush1.msra.mxu0 0.0
    %2081 = vmatprep.subr.mxu0 0.0
    %2082 = vmatpush1.msra.mxu0 0.0
    %2083 = vmatprep.subr.mxu0 0.0
    %2084 = vmatpush1.msra.mxu0 0.0
    %2085 = vmatprep.subr.mxu0 0.0
    %2086 = vmatpush1.msra.mxu0 0.0
    %2087 = vmatprep.subr.mxu0 0.0
    %2088 = vmatpush1.msra.mxu0 0.0
    %2089 = vmatprep.subr.mxu0 0.0
    %2090 = vmatpush1.msra.mxu0 0.0
    %2091 = vmatprep.mubr.f32.mxu0 0.0
    %2092 = vmatmul.mubr.f32.gmra.mrb[0].mxu0 %v1996
    %v2093 = vpop.f32.mrb[0].mxu0
    %v2094 = vadd.f32 %v2025, %v2093
    %v2095 = vpop.f32.mrb[0].mxu0
    %2096 = vmatprep.mubr.f32.mxu0 0.0
    %2097 = vmatmul.mubr.f32.gmra.mrb[0].mxu0 %v1997
    %v2098 = vpop.f32.mrb[0].mxu0
    %v2099 = vadd.f32 %v2025, %v2098
    %v2100 = vpop.f32.mrb[0].mxu0
    %2101 = vmatprep.mubr.f32.mxu0 0.0
    %2102 = vmatmul.mubr.f32.gmra.mrb[0].mxu0 %v1998
    %v2103 = vpop.f32.mrb[0].mxu0
    %v2104 = vadd.f32 %v2025, %v2103
    %v2105 = vpop.f32.mrb[0].mxu0
    %2106 = vmatprep.mubr.f32.mxu0 0.0
    %2107 = vmatmul.mubr.f32.gmra.mrb[0].mxu0 %v1999
    %v2108 = vpop.f32.mrb[0].mxu0
    %v2109 = vadd.f32 %v2025, %v2108
    %v2110 = vpop.f32.mrb[0].mxu0
    %2111 = vmatprep.mubr.f32.mxu0 0.0
    %2112 = vmatmul.mubr.f32.gmra.mrb[0].mxu0 %v2000
    %v2113 = vpop.f32.mrb[0].mxu0
    %v2114 = vadd.f32 %v2025, %v2113
    %v2115 = vpop.f32.mrb[0].mxu0
    %2116 = vmatprep.mubr.f32.mxu0 0.0
    %2117 = vmatmul.mubr.f32.gmra.mrb[0].mxu0 %v2001
    %v2118 = vpop.f32.mrb[0].mxu0
    %v2119 = vadd.f32 %v2025, %v2118
    %v2120 = vpop.f32.mrb[0].mxu0
    %2121 = vmatprep.mubr.f32.mxu0 0.0
    %2122 = vmatmul.mubr.f32.gmra.mrb[0].mxu0 %v2002
    %v2123 = vpop.f32.mrb[0].mxu0
    %v2124 = vadd.f32 %v2025, %v2123
    %v2125 = vpop.f32.mrb[0].mxu0
    %2126 = vmatprep.mubr.f32.mxu0 0.0
    %2127 = vmatmul.mubr.f32.gmra.mrb[0].mxu0 %v2003
    %v2128 = vpop.f32.mrb[0].mxu0
    %v2129 = vadd.f32 %v2025, %v2128
    %v2130 = vpop.f32.mrb[0].mxu0
    %2131 = vdwg.mxu0
    %2132 = vst [vmem:[#allocation15] sm:$0xff] %v2094
    %2133 = vst [vmem:[#allocation15 + $0x8] sm:$0xff] %v2099
    %2134 = vst [vmem:[#allocation15 + $0x10] sm:$0xff] %v2104
    %2135 = vst [vmem:[#allocation15 + $0x18] sm:$0xff] %v2109
    %2136 = vst [vmem:[#allocation15 + $0x20] sm:$0xff] %v2114
    %2137 = vst [vmem:[#allocation15 + $0x28] sm:$0xff] %v2119
    %2138 = vst [vmem:[#allocation15 + $0x30] sm:$0xff] %v2124
    %2139 = vst [vmem:[#allocation15 + $0x38] sm:$0xff] %v2129
    // Predicated region
    $region70: #{tpu_custom_call.1} parent=1 // pred_check
      _
    $region71: #{tpu_custom_call.1} parent=1 // pred_check_branch
      %2141 = sbr.rel (0) target = $region73
    $region72: #{tpu_custom_call.1} parent=1 // pred_region
      %s2143 = ssub.s32 1024, 1024
      %2144 = vsyncadd [#allocation6], %s2143
      %s2145 = sshll.u32 [#allocation15], 4
      %s2146 = int_to_ptr.vmem [resolvable:$true] %s2145
      %2151 = dma.vmem_to_hbm [thread:$0]  %s2146, 1024, %s10, [#allocation6], 128, 128, 8
    $region73: #{tpu_custom_call.1} parent=1 // pred_fallthru
      _
    // Predicated region
    $region74: #{tpu_custom_call.1} parent=1 // pred_check
      _
    $region75: #{tpu_custom_call.1} parent=1 // pred_check_branch
      %2153 = sbr.rel (0) target = $region77
    $region76: #{tpu_custom_call.1} parent=1 // pred_region
      %s2155 = ssub.s32 1024, 1024
      %2156 = vsyncadd [#allocation17], %s2155
      %s2157 = sshll.u32 [#allocation16], 4
      %s2158 = int_to_ptr.vmem [resolvable:$true] %s2157
      %2163 = dma.vmem_to_hbm [thread:$0]  %s2158, 1024, %s11, [#allocation17], 128, 128, 8
    $region77: #{tpu_custom_call.1} parent=1 // pred_fallthru
      _
    // Predicated region
    $region78: #{tpu_custom_call.1} parent=1 // pred_check
      _
    $region79: #{tpu_custom_call.1} parent=1 // pred_check_branch
      %2165 = sbr.rel (0) target = $region81
    $region80: #{tpu_custom_call.1} parent=1 // pred_region
      %2166 = dma.done [#allocation6], 1024
    $region81: #{tpu_custom_call.1} parent=1 // pred_fallthru
      _
    // Predicated region
    $region82: #{tpu_custom_call.1} parent=1 // pred_check
      _
    $region83: #{tpu_custom_call.1} parent=1 // pred_check_branch
      %2168 = sbr.rel (0) target = $region85
    $region84: #{tpu_custom_call.1} parent=1 // pred_region
      %2169 = dma.done [#allocation17], 1024
    $region85: #{tpu_custom_call.1} parent=1 // pred_fallthru
      _
    %2170 = vsyncpa [#allocation5], 1
    %2171 = vsyncpa [#allocation8], 1
    %2172 = vsyncpa [#allocation11], 1
    %2173 = vsyncpa [#allocation14], 1
    %2174 = vsyncpa [#allocation6], 1
    %2175 = vsyncpa [#allocation17], 1

</llo_original>
